<compile_context>
chip_gen: v7x
topology: tpu7x:2x2x1
jax: 0.10.0
libtpu: 0.0.40
codegen_flags: <defaults>
</compile_context>

<pallas_src>
import functools
import math

import numpy as np
import jax
import jax.numpy as jnp
from jax.experimental import pallas as pl
from jax.experimental.pallas import tpu as pltpu


# ----------------------------------------------------------------------------- helpers
def _prep_low_rate(f0, key, sampling_rate, dim, voiced_threshold, upp):
    """Frame-rate (cheap, O(B*dim*L)) signals shared by kernel wrapper and reference."""
    k_rand, k_noise = jax.random.split(key)
    B, L = f0.shape
    f0 = f0.astype(jnp.float32)
    harm = jnp.arange(1, dim + 1, dtype=jnp.float32)
    f0_buf = f0[:, None, :] * harm[None, :, None]                     # (B, dim, L)
    rad = jnp.mod(f0_buf / float(sampling_rate), 1.0)
    rand_ini = jax.random.uniform(k_rand, (B, dim), jnp.float32)
    rand_ini = rand_ini.at[:, 0].set(0.0)
    rad = rad.at[:, :, 0].add(rand_ini)                               # random initial phase
    cum = jnp.cumsum(rad, axis=-1) * float(upp)                       # only used by the reference
    uv_low = (f0 > float(voiced_threshold)).astype(jnp.float32)[:, None, :]   # (B, 1, L)
    return rad, cum, uv_low, k_noise


def _choose_frames_per_tile(L, upp, target=512, cap=1024):
    """Frames per time tile: tile = ft*upp, preferably a multiple of 128, <= cap lanes."""
    if L * upp <= cap:
        return L                                     # single full-extent tile
    ft = max(1, -(-target // upp))                   # ceil(target / upp)
    g = 128 // math.gcd(upp, 128)                    # smallest ft giving a 128-multiple tile
    ft_aligned = -(-ft // g) * g
    if ft_aligned * upp <= cap:
        ft = ft_aligned
    return min(ft, L)


def _hash_i32(x):
    """Cheap integer mixer (3 xorshift-multiply rounds), int32 wrap-around semantics."""
    c = jnp.int32(0x45D9F3B)
    x = jax.lax.shift_right_logical(x, jnp.int32(16)) ^ x
    x = x * c
    x = jax.lax.shift_right_logical(x, jnp.int32(16)) ^ x
    x = x * c
    x = jax.lax.shift_right_logical(x, jnp.int32(16)) ^ x
    return x


# ----------------------------------------------------------------------------- kernel
def _sine_gen_kernel(seed_ref,                         # scalar prefetch (SMEM)
                     low_ref, oneh_ref, qp1_ref,       # inputs
                     *refs,                            # outputs + scratch
                     dim, ft, tile, upp, sine_amp, noise_std, emit_noise):
    if emit_noise:
        sine_o_ref, uv_o_ref, noise_o_ref, carry_ref = refs
    else:
        sine_o_ref, uv_o_ref, carry_ref = refs
        noise_o_ref = None

    b = pl.program_id(0)
    t = pl.program_id(1)
    n_t = pl.num_programs(1)

    # reset the per-batch phase carry at the first time tile
    @pl.when(t == 0)
    def _():
        carry_ref[...] = jnp.zeros((dim, 1), jnp.float32)

    # frame-rate block for this tile: rows = [rad | D (tile-local excl. cumsum * upp) | uv]
    block = low_ref[0, 0]                              # (2*dim+1, ft)

    # nearest up-sample (frame -> sample rate) on the otherwise idle MXU:
    # one matmul against a constant one-hot matrix, HIGHEST precision keeps f32 accuracy.
    up = jnp.dot(block, oneh_ref[...],
                 preferred_element_type=jnp.float32,
                 precision=jax.lax.Precision.HIGHEST)  # (2*dim+1, tile)
    rad_up = up[0:dim]                                 # rad at each output sample's frame
    d_up = up[dim:2 * dim]                             # upp * (sum of rad over earlier frames in tile)
    uv = jnp.where(up[2 * dim:2 * dim + 1] > 0.5, 1.0, 0.0)   # (1, tile), exact {0., 1.}

    # scan-free phase: the PyTorch wrap/cumsum_shift terms are integers, so
    # sin(2*pi*phase) == sin(2*pi*(carry + upp*D + (q+1)*rad)); carry kept mod 1.
    qp1 = qp1_ref[...]                                 # (1, tile) = (j % upp) + 1
    phase = carry_ref[...] + d_up + qp1 * rad_up
    phase = phase - jnp.floor(phase)                   # bounded arg for accurate f32 sin
    sine = jnp.sin(phase * (2.0 * np.pi)) * sine_amp

    # carry update: total rad over this tile's ft frames (mod 1)
    tile_sum = block[dim:2 * dim, ft - 1:ft] + block[0:dim, ft - 1:ft] * float(upp)
    new_c = carry_ref[...] + tile_sum
    carry_ref[...] = new_c - jnp.floor(new_c)

    # Gaussian noise: counter-hash RNG (portable: Mosaic + interpret) + paired Box-Muller
    half = (tile + 1) // 2
    row = jax.lax.broadcasted_iota(jnp.int32, (dim, half), 0)
    col = jax.lax.broadcasted_iota(jnp.int32, (dim, half), 1)
    g = b * n_t + t
    cnt = (g * dim + row) * half + col + seed_ref[0]
    h1 = _hash_i32(cnt)
    h2 = _hash_i32(h1 ^ jnp.int32(0x68E31DA4))
    u1 = ((h1 & jnp.int32(0x7FFFFF)).astype(jnp.float32) + 1.0) * (1.0 / 8388608.0)  # (0, 1]
    u2 = (h2 & jnp.int32(0x7FFFFF)).astype(jnp.float32) * (1.0 / 8388608.0)          # [0, 1)
    r = jnp.sqrt(-2.0 * jnp.log(u1))
    ang = (2.0 * np.pi) * u2
    z = jnp.concatenate([r * jnp.cos(ang), r * jnp.sin(ang)], axis=1)                 # (dim, 2*half)
    if 2 * half != tile:
        z = z[:, :tile]

    noise_amp = uv * noise_std + (1.0 - uv) * (sine_amp / 3.0)
    noise = noise_amp * z

    sine_o_ref[...] = (sine * uv + noise).reshape(sine_o_ref.shape)
    uv_o_ref[...] = uv.reshape(uv_o_ref.shape)
    if emit_noise:
        noise_o_ref[...] = noise.reshape(noise_o_ref.shape)


# ----------------------------------------------------------------------------- wrapper
def sine_gen_forward(f0, upp, *, sampling_rate, harmonic_num=0, sine_amp=0.1,
                     noise_std=0.003, voiced_threshold=0, key=None,
                     pytorch_layout=False, return_noise=True):
    """f0: (B, L) float32.
    pytorch_layout=False -> (B, dim, L*upp), (B, 1, L*upp)[, (B, dim, L*upp)]  (lane-dense)
    pytorch_layout=True  -> (B, L*upp, dim), (B, L*upp, 1)[, (B, L*upp, dim)]  (module parity)."""
    B, L = f0.shape
    dim = harmonic_num + 1
    upp = int(upp)
    Lout = L * upp
    if key is None:
        key = jax.random.PRNGKey(0)

    rad, _cum, uv_low, k_noise = _prep_low_rate(
        f0, key, sampling_rate, dim, voiced_threshold, upp)

    # ---- tiling ----
    ft = _choose_frames_per_tile(L, upp)
    tile = ft * upp
    n_tiles = -(-L // ft)
    Lp = n_tiles * ft
    aligned = (tile % 128 == 0) or (n_tiles == 1)

    # ---- frame-rate input: [rad | D | uv] reshaped per tile (no duplication/gather) ----
    pad = Lp - L
    radp = jnp.pad(rad, ((0, 0), (0, 0), (0, pad)))
    uvp = jnp.pad(uv_low, ((0, 0), (0, 0), (0, pad)))
    rad_t = radp.reshape(B, dim, n_tiles, ft)
    d_t = (jnp.cumsum(rad_t, axis=-1) - rad_t) * float(upp)   # tile-local exclusive cumsum * upp
    uv_t = uvp.reshape(B, 1, n_tiles, ft)
    low = jnp.concatenate([rad_t, d_t, uv_t], axis=1)          # (B, 2*dim+1, n_tiles, ft)
    low = jnp.transpose(low, (0, 2, 1, 3))                     # (B, n_tiles, 2*dim+1, ft)

    # ---- constant (resident) upsample matrices ----
    jloc = np.arange(tile)
    oneh = (jloc[None, :] // upp == np.arange(ft)[:, None]).astype(np.float32)   # (ft, tile)
    qp1 = ((jloc % upp) + 1).astype(np.float32)[None, :]                         # (1, tile)

    seed = jax.random.randint(k_noise, (1,), 0, np.iinfo(np.int32).max, dtype=jnp.int32)

    kernel = functools.partial(
        _sine_gen_kernel, dim=dim, ft=int(ft), tile=int(tile), upp=upp,
        sine_amp=float(sine_amp), noise_std=float(noise_std), emit_noise=return_noise)

    if aligned:
        Lo_p = n_tiles * tile
        out_shape = [jax.ShapeDtypeStruct((B, dim, Lo_p), jnp.float32),
                     jax.ShapeDtypeStruct((B, 1, Lo_p), jnp.float32)]
        out_specs = [pl.BlockSpec((1, dim, tile), lambda b, t, s: (b, 0, t)),
                     pl.BlockSpec((1, 1, tile), lambda b, t, s: (b, 0, t))]
    else:
        # odd upp: tile is not a multiple of 128 -> use a 4-D layout whose last two
        # block dims equal the full array dims (legal for Mosaic), fix layout after.
        out_shape = [jax.ShapeDtypeStruct((B, n_tiles, dim, tile), jnp.float32),
                     jax.ShapeDtypeStruct((B, n_tiles, 1, tile), jnp.float32)]
        out_specs = [pl.BlockSpec((1, 1, dim, tile), lambda b, t, s: (b, t, 0, 0)),
                     pl.BlockSpec((1, 1, 1, tile), lambda b, t, s: (b, t, 0, 0))]
    if return_noise:
        out_shape.append(out_shape[0])
        out_specs.append(out_specs[0])

    grid_spec = pltpu.PrefetchScalarGridSpec(
        num_scalar_prefetch=1,
        grid=(B, n_tiles),
        in_specs=[
            pl.BlockSpec((1, 1, 2 * dim + 1, ft), lambda b, t, s: (b, t, 0, 0)),
            pl.BlockSpec((ft, tile), lambda b, t, s: (0, 0)),     # resident one-hot
            pl.BlockSpec((1, tile), lambda b, t, s: (0, 0)),      # resident (j%upp)+1
        ],
        out_specs=tuple(out_specs),
        scratch_shapes=[pltpu.VMEM((dim, 1), jnp.float32)],       # phase carry (mod 1)
    )

    outs = pl.pallas_call(
        kernel,
        grid_spec=grid_spec,
        out_shape=tuple(out_shape),
        compiler_params=pltpu.CompilerParams(
            dimension_semantics=("parallel", "arbitrary")),
    )(seed, low, jnp.asarray(oneh), jnp.asarray(qp1))

    if return_noise:
        sine_p, uv_p, noise_p = outs
    else:
        sine_p, uv_p = outs
        noise_p = None

    def _fix(x, ch):
        if x is None:
            return None
        if not aligned:
            x = jnp.transpose(x, (0, 2, 1, 3))                    # (B, ch, n_tiles, tile)
        x = x.reshape(B, ch, n_tiles * tile)
        if n_tiles * tile != Lout:
            x = x[:, :, :Lout]
        return x

    sine = _fix(sine_p, dim)
    uv = _fix(uv_p, 1)
    noise = _fix(noise_p, dim)

    if pytorch_layout:
        # Kept only for drop-in parity with the PyTorch module; downstream consumers
        # should prefer the lane-dense (B, dim, Lout) layout.
        tr = lambda x: None if x is None else jnp.transpose(x, (0, 2, 1))
        sine, uv, noise = tr(sine), tr(uv), tr(noise)

    if return_noise:
        return sine, uv, noise
    return sine, uv


# ----------------------------------------------------------------------------- reference
def sine_gen_reference(f0, upp, *, sampling_rate, harmonic_num, sine_amp,
                       voiced_threshold, key):
    """Pure-JAX mirror of the deterministic part of the PyTorch forward.
    Returns (sine_waves * uv, uv) in (B, dim, Lout) layout."""
    B, L = f0.shape
    dim = harmonic_num + 1
    upp = int(upp)
    Lout = L * upp
    rad, cum, uv_low, _ = _prep_low_rate(
        f0, key, sampling_rate, dim, voiced_threshold, upp)

    j = np.arange(Lout)
    pos = j * (L - 1) / (Lout - 1) if Lout > 1 else np.zeros(Lout)
    i0 = np.clip(np.floor(pos).astype(np.int64), 0, L - 1)
    i1 = np.minimum(i0 + 1, L - 1)
    w = (pos - i0).astype(np.float32)[None, None, :]
    c0 = np.minimum(j // upp, L - 1)

    too = cum[:, :, i0] * (1.0 - w) + cum[:, :, i1] * w
    too = too - jnp.floor(too)
    rad_up = rad[:, :, c0]
    wrap = (too[:, :, 1:] - too[:, :, :-1]) < 0
    shift = jnp.concatenate(
        [jnp.zeros_like(too[:, :, :1]), jnp.where(wrap, -1.0, 0.0)], axis=-1)
    phase = jnp.cumsum(rad_up + shift, axis=-1)
    sine = jnp.sin(phase * (2.0 * np.pi)) * sine_amp
    uv = uv_low[:, :, c0]
    return sine * uv, uv


# ----------------------------------------------------------------------------- demo
if __name__ == "__main__":
    key = jax.random.PRNGKey(0)
    kf, kd, kg = jax.random.split(key, 3)

    B, L, upp = 2, 48, 32                 # Lout = 1536 -> 3 time tiles of 512 lanes
    harmonic_num = 7                      # dim = 8
    sampling_rate = 16000

    # f0 in Hz with some unvoiced (== 0) frames, as the module expects
    f0 = jax.random.uniform(kf, (B, L), jnp.float32, minval=80.0, maxval=400.0)
    voiced = jax.random.bernoulli(kd, 0.75, (B, L)).astype(jnp.float32)
    f0 = f0 * voiced

    sine, uv, noise = sine_gen_forward(
        f0, upp, sampling_rate=sampling_rate, harmonic_num=harmonic_num,
        sine_amp=0.1, noise_std=0.003, voiced_threshold=0, key=kg,
        pytorch_layout=False, return_noise=True)
    jax.block_until_ready((sine, uv, noise))

    Lout = L * upp
    dim = harmonic_num + 1
    assert sine.shape == (B, dim, Lout)
    assert uv.shape == (B, 1, Lout)
    assert noise.shape == (B, dim, Lout)
    assert bool(jnp.all(jnp.isfinite(sine)))
    assert bool(jnp.all(jnp.isfinite(noise)))
    assert bool(jnp.all((uv == 0.0) | (uv == 1.0)))

    # deterministic part: (sine_out - noise_out) == sine * uv must match pure-JAX ref
    det_ref, uv_ref = sine_gen_reference(
        f0, upp, sampling_rate=sampling_rate, harmonic_num=harmonic_num,
        sine_amp=0.1, voiced_threshold=0, key=kg)
    err = float(jnp.max(jnp.abs((sine - noise) - det_ref)))
    assert err < 2e-3, f"deterministic part mismatch: {err}"
    assert bool(jnp.all(uv == uv_ref))

    print("KERNEL_OK")
</pallas_src>

<mosaic_0001>
module attributes {stable_mosaic.version = 11 : i64} {
  func.func @_sine_gen_kernel(%arg0: i32, %arg1: i32, %arg2: memref<1xi32, #tpu.memory_space<smem>>, %arg3: memref<1x1x17x16xf32, #tpu.memory_space<vmem>>, %arg4: memref<16x512xf32, #tpu.memory_space<vmem>>, %arg5: memref<1x512xf32, #tpu.memory_space<vmem>>, %arg6: memref<1x8x512xf32, #tpu.memory_space<vmem>>, %arg7: memref<1x1x512xf32, #tpu.memory_space<vmem>>, %arg8: memref<1x8x512xf32, #tpu.memory_space<vmem>>, %arg9: memref<8x1xf32, #tpu.memory_space<vmem>>) attributes {dimension_semantics = [#tpu.dimension_semantics<parallel>, #tpu.dimension_semantics<arbitrary>], iteration_bounds = array<i64: 2, 3>, scalar_prefetch = 1 : i64, scratch_operands = 1 : i64, tpu.core_type = #tpu.core_type<tc>, window_params = [{transform_indices = @transform_0, window_bounds = array<i64: 1, 1, 17, 16>}, {pipeline_mode = #tpu.pipeline_mode<synchronous>, transform_indices = @transform_1, window_bounds = array<i64: 16, 512>}, {pipeline_mode = #tpu.pipeline_mode<synchronous>, transform_indices = @transform_2, window_bounds = array<i64: 1, 512>}, {transform_indices = @transform_3, window_bounds = array<i64: 1, 8, 512>}, {transform_indices = @transform_4, window_bounds = array<i64: 1, 1, 512>}, {transform_indices = @transform_5, window_bounds = array<i64: 1, 8, 512>}]} {
    %c0_i32 = arith.constant 0 : i32
    %0 = arith.cmpi eq, %arg1, %c0_i32 : i32
    %1 = arith.extui %0 : i1 to i32
    %c0_i32_0 = arith.constant 0 : i32
    %2 = arith.cmpi ne, %1, %c0_i32_0 : i32
    scf.if %2 {
      %cst_47 = arith.constant 0.000000e+00 : f32
      %121 = vector.broadcast %cst_47 : f32 to vector<8x1xf32>
      %c0_48 = arith.constant 0 : index
      %c0_49 = arith.constant 0 : index
      %122 = vector.load %arg9[%c0_48, %c0_49] : memref<8x1xf32, #tpu.memory_space<vmem>>, vector<8x1xf32>
      tpu.vector_store %arg9[%c0_48, %c0_49], %121 {strides = array<i32>} : memref<8x1xf32, #tpu.memory_space<vmem>>, vector<8x1xf32>,
    } else {
    }
    %c0 = arith.constant 0 : index
    %c0_1 = arith.constant 0 : index
    %c0_2 = arith.constant 0 : index
    %c0_3 = arith.constant 0 : index
    %3 = vector.load %arg3[%c0, %c0_1, %c0_2, %c0_3] : memref<1x1x17x16xf32, #tpu.memory_space<vmem>>, vector<1x1x17x16xf32>
    %4 = vector.shape_cast %3 : vector<1x1x17x16xf32> to vector<17x16xf32>
    %c0_4 = arith.constant 0 : index
    %c0_5 = arith.constant 0 : index
    %5 = vector.load %arg4[%c0_4, %c0_5] : memref<16x512xf32, #tpu.memory_space<vmem>>, vector<16x512xf32>
    %cst = arith.constant dense<0.000000e+00> : vector<17x512xf32>
    %6 = tpu.matmul %4, %5, %cst {dimension_numbers = #tpu.dot_dimension_numbers<[1], [0], [0], [1], [0, 0, 1, 1], [], []>, precision = #tpu.contract_precision<fp32>} : vector<17x16xf32>, vector<16x512xf32>, vector<17x512xf32> -> vector<17x512xf32>
    %7 = vector.extract_strided_slice %6 {offsets = [0, 0], sizes = [8, 512], strides = [1, 1]} : vector<17x512xf32> to vector<8x512xf32>
    %8 = vector.extract_strided_slice %6 {offsets = [8, 0], sizes = [8, 512], strides = [1, 1]} : vector<17x512xf32> to vector<8x512xf32>
    %9 = vector.extract_strided_slice %6 {offsets = [16, 0], sizes = [1, 512], strides = [1, 1]} : vector<17x512xf32> to vector<1x512xf32>
    %cst_6 = arith.constant 5.000000e-01 : f32
    %10 = vector.broadcast %cst_6 : f32 to vector<1x512xf32>
    %11 = arith.cmpf ogt, %9, %10 : vector<1x512xf32>
    %cst_7 = arith.constant 1.000000e+00 : f32
    %cst_8 = arith.constant 0.000000e+00 : f32
    %12 = vector.broadcast %cst_7 : f32 to vector<1x512xf32>
    %13 = vector.broadcast %cst_8 : f32 to vector<1x512xf32>
    %14 = arith.select %11, %12, %13 : vector<1x512xi1>, vector<1x512xf32>
    %c0_9 = arith.constant 0 : index
    %c0_10 = arith.constant 0 : index
    %15 = vector.load %arg5[%c0_9, %c0_10] : memref<1x512xf32, #tpu.memory_space<vmem>>, vector<1x512xf32>
    %c0_11 = arith.constant 0 : index
    %c0_12 = arith.constant 0 : index
    %16 = vector.load %arg9[%c0_11, %c0_12] : memref<8x1xf32, #tpu.memory_space<vmem>>, vector<8x1xf32>
    %17 = vector.broadcast %16 : vector<8x1xf32> to vector<8x512xf32>
    %18 = arith.addf %17, %8 : vector<8x512xf32>
    %19 = vector.broadcast %15 : vector<1x512xf32> to vector<8x512xf32>
    %20 = arith.mulf %19, %7 : vector<8x512xf32>
    %21 = arith.addf %18, %20 : vector<8x512xf32>
    %22 = math.floor %21 : vector<8x512xf32>
    %23 = arith.subf %21, %22 : vector<8x512xf32>
    %cst_13 = arith.constant 6.28318548 : f32
    %24 = vector.broadcast %cst_13 : f32 to vector<8x512xf32>
    %25 = arith.mulf %23, %24 : vector<8x512xf32>
    %26 = math.sin %25 : vector<8x512xf32>
    %cst_14 = arith.constant 1.000000e-01 : f32
    %27 = vector.broadcast %cst_14 : f32 to vector<8x512xf32>
    %28 = arith.mulf %26, %27 : vector<8x512xf32>
    %29 = vector.extract_strided_slice %4 {offsets = [8, 15], sizes = [8, 1], strides = [1, 1]} : vector<17x16xf32> to vector<8x1xf32>
    %30 = vector.extract_strided_slice %4 {offsets = [0, 15], sizes = [8, 1], strides = [1, 1]} : vector<17x16xf32> to vector<8x1xf32>
    %cst_15 = arith.constant 3.200000e+01 : f32
    %31 = vector.broadcast %cst_15 : f32 to vector<8x1xf32>
    %32 = arith.mulf %30, %31 : vector<8x1xf32>
    %33 = arith.addf %29, %32 : vector<8x1xf32>
    %c0_16 = arith.constant 0 : index
    %c0_17 = arith.constant 0 : index
    %34 = vector.load %arg9[%c0_16, %c0_17] : memref<8x1xf32, #tpu.memory_space<vmem>>, vector<8x1xf32>
    %35 = arith.addf %34, %33 : vector<8x1xf32>
    %36 = math.floor %35 : vector<8x1xf32>
    %37 = arith.subf %35, %36 : vector<8x1xf32>
    %c0_18 = arith.constant 0 : index
    %c0_19 = arith.constant 0 : index
    %38 = vector.load %arg9[%c0_18, %c0_19] : memref<8x1xf32, #tpu.memory_space<vmem>>, vector<8x1xf32>
    tpu.vector_store %arg9[%c0_18, %c0_19], %37 {strides = array<i32>} : memref<8x1xf32, #tpu.memory_space<vmem>>, vector<8x1xf32>,
    %39 = tpu.iota {dimensions = array<i32: 0>} : vector<8x256xi32>
    %40 = tpu.iota {dimensions = array<i32: 1>} : vector<8x256xi32>
    %c3_i32 = arith.constant 3 : i32
    %41 = arith.muli %arg0, %c3_i32 : i32
    %42 = arith.addi %41, %arg1 : i32
    %c8_i32 = arith.constant 8 : i32
    %43 = arith.muli %42, %c8_i32 : i32
    %44 = vector.broadcast %43 : i32 to vector<8x256xi32>
    %45 = arith.addi %44, %39 : vector<8x256xi32>
    %c256_i32 = arith.constant 256 : i32
    %46 = vector.broadcast %c256_i32 : i32 to vector<8x256xi32>
    %47 = arith.muli %45, %46 : vector<8x256xi32>
    %48 = arith.addi %47, %40 : vector<8x256xi32>
    %c0_20 = arith.constant 0 : index
    %49 = memref.load %arg2[%c0_20] : memref<1xi32, #tpu.memory_space<smem>>
    %50 = vector.broadcast %49 : i32 to vector<8x256xi32>
    %51 = arith.addi %48, %50 : vector<8x256xi32>
    %c16_i32 = arith.constant 16 : i32
    %52 = vector.broadcast %c16_i32 : i32 to vector<8x256xi32>
    %53 = arith.shrui %51, %52 : vector<8x256xi32>
    %54 = arith.xori %53, %51 : vector<8x256xi32>
    %c73244475_i32 = arith.constant 73244475 : i32
    %55 = vector.broadcast %c73244475_i32 : i32 to vector<8x256xi32>
    %56 = arith.muli %54, %55 : vector<8x256xi32>
    %c16_i32_21 = arith.constant 16 : i32
    %57 = vector.broadcast %c16_i32_21 : i32 to vector<8x256xi32>
    %58 = arith.shrui %56, %57 : vector<8x256xi32>
    %59 = arith.xori %58, %56 : vector<8x256xi32>
    %c73244475_i32_22 = arith.constant 73244475 : i32
    %60 = vector.broadcast %c73244475_i32_22 : i32 to vector<8x256xi32>
    %61 = arith.muli %59, %60 : vector<8x256xi32>
    %c16_i32_23 = arith.constant 16 : i32
    %62 = vector.broadcast %c16_i32_23 : i32 to vector<8x256xi32>
    %63 = arith.shrui %61, %62 : vector<8x256xi32>
    %64 = arith.xori %63, %61 : vector<8x256xi32>
    %c1759714724_i32 = arith.constant 1759714724 : i32
    %65 = vector.broadcast %c1759714724_i32 : i32 to vector<8x256xi32>
    %66 = arith.xori %64, %65 : vector<8x256xi32>
    %c16_i32_24 = arith.constant 16 : i32
    %67 = vector.broadcast %c16_i32_24 : i32 to vector<8x256xi32>
    %68 = arith.shrui %66, %67 : vector<8x256xi32>
    %69 = arith.xori %68, %66 : vector<8x256xi32>
    %c73244475_i32_25 = arith.constant 73244475 : i32
    %70 = vector.broadcast %c73244475_i32_25 : i32 to vector<8x256xi32>
    %71 = arith.muli %69, %70 : vector<8x256xi32>
    %c16_i32_26 = arith.constant 16 : i32
    %72 = vector.broadcast %c16_i32_26 : i32 to vector<8x256xi32>
    %73 = arith.shrui %71, %72 : vector<8x256xi32>
    %74 = arith.xori %73, %71 : vector<8x256xi32>
    %c73244475_i32_27 = arith.constant 73244475 : i32
    %75 = vector.broadcast %c73244475_i32_27 : i32 to vector<8x256xi32>
    %76 = arith.muli %74, %75 : vector<8x256xi32>
    %c16_i32_28 = arith.constant 16 : i32
    %77 = vector.broadcast %c16_i32_28 : i32 to vector<8x256xi32>
    %78 = arith.shrui %76, %77 : vector<8x256xi32>
    %79 = arith.xori %78, %76 : vector<8x256xi32>
    %c8388607_i32 = arith.constant 8388607 : i32
    %80 = vector.broadcast %c8388607_i32 : i32 to vector<8x256xi32>
    %81 = arith.andi %64, %80 : vector<8x256xi32>
    %82 = arith.sitofp %81 : vector<8x256xi32> to vector<8x256xf32>
    %cst_29 = arith.constant 1.000000e+00 : f32
    %83 = vector.broadcast %cst_29 : f32 to vector<8x256xf32>
    %84 = arith.addf %82, %83 : vector<8x256xf32>
    %cst_30 = arith.constant 1.1920929E-7 : f32
    %85 = vector.broadcast %cst_30 : f32 to vector<8x256xf32>
    %86 = arith.mulf %84, %85 : vector<8x256xf32>
    %c8388607_i32_31 = arith.constant 8388607 : i32
    %87 = vector.broadcast %c8388607_i32_31 : i32 to vector<8x256xi32>
    %88 = arith.andi %79, %87 : vector<8x256xi32>
    %89 = arith.sitofp %88 : vector<8x256xi32> to vector<8x256xf32>
    %cst_32 = arith.constant 1.1920929E-7 : f32
    %90 = vector.broadcast %cst_32 : f32 to vector<8x256xf32>
    %91 = arith.mulf %89, %90 : vector<8x256xf32>
    %92 = math.log %86 : vector<8x256xf32>
    %cst_33 = arith.constant -2.000000e+00 : f32
    %93 = vector.broadcast %cst_33 : f32 to vector<8x256xf32>
    %94 = arith.mulf %93, %92 : vector<8x256xf32>
    %95 = math.sqrt %94 : vector<8x256xf32>
    %cst_34 = arith.constant 6.28318548 : f32
    %96 = vector.broadcast %cst_34 : f32 to vector<8x256xf32>
    %97 = arith.mulf %96, %91 : vector<8x256xf32>
    %98 = math.cos %97 : vector<8x256xf32>
    %99 = arith.mulf %95, %98 : vector<8x256xf32>
    %100 = math.sin %97 : vector<8x256xf32>
    %101 = arith.mulf %95, %100 : vector<8x256xf32>
    %102 = tpu.concatenate %99, %101 in 1 : vector<8x256xf32>, vector<8x256xf32> -> vector<8x512xf32>
    %cst_35 = arith.constant 3.000000e-03 : f32
    %103 = vector.broadcast %cst_35 : f32 to vector<1x512xf32>
    %104 = arith.mulf %14, %103 : vector<1x512xf32>
    %cst_36 = arith.constant 1.000000e+00 : f32
    %105 = vector.broadcast %cst_36 : f32 to vector<1x512xf32>
    %106 = arith.subf %105, %14 : vector<1x512xf32>
    %cst_37 = arith.constant 0.0333333351 : f32
    %107 = vector.broadcast %cst_37 : f32 to vector<1x512xf32>
    %108 = arith.mulf %106, %107 : vector<1x512xf32>
    %109 = arith.addf %104, %108 : vector<1x512xf32>
    %110 = vector.broadcast %109 : vector<1x512xf32> to vector<8x512xf32>
    %111 = arith.mulf %110, %102 : vector<8x512xf32>
    %112 = vector.broadcast %14 : vector<1x512xf32> to vector<8x512xf32>
    %113 = arith.mulf %28, %112 : vector<8x512xf32>
    %114 = arith.addf %113, %111 : vector<8x512xf32>
    %115 = vector.shape_cast %114 : vector<8x512xf32> to vector<1x8x512xf32>
    %c0_38 = arith.constant 0 : index
    %c0_39 = arith.constant 0 : index
    %c0_40 = arith.constant 0 : index
    %116 = vector.load %arg6[%c0_38, %c0_39, %c0_40] : memref<1x8x512xf32, #tpu.memory_space<vmem>>, vector<1x8x512xf32>
    tpu.vector_store %arg6[%c0_38, %c0_39, %c0_40], %115 {strides = array<i32>} : memref<1x8x512xf32, #tpu.memory_space<vmem>>, vector<1x8x512xf32>,
    %117 = vector.shape_cast %14 : vector<1x512xf32> to vector<1x1x512xf32>
    %c0_41 = arith.constant 0 : index
    %c0_42 = arith.constant 0 : index
    %c0_43 = arith.constant 0 : index
    %118 = vector.load %arg7[%c0_41, %c0_42, %c0_43] : memref<1x1x512xf32, #tpu.memory_space<vmem>>, vector<1x1x512xf32>
    tpu.vector_store %arg7[%c0_41, %c0_42, %c0_43], %117 {strides = array<i32>} : memref<1x1x512xf32, #tpu.memory_space<vmem>>, vector<1x1x512xf32>,
    %119 = vector.shape_cast %111 : vector<8x512xf32> to vector<1x8x512xf32>
    %c0_44 = arith.constant 0 : index
    %c0_45 = arith.constant 0 : index
    %c0_46 = arith.constant 0 : index
    %120 = vector.load %arg8[%c0_44, %c0_45, %c0_46] : memref<1x8x512xf32, #tpu.memory_space<vmem>>, vector<1x8x512xf32>
    tpu.vector_store %arg8[%c0_44, %c0_45, %c0_46], %119 {strides = array<i32>} : memref<1x8x512xf32, #tpu.memory_space<vmem>>, vector<1x8x512xf32>,
    return
  }
  func.func @transform_0(%arg0: i32, %arg1: i32, %arg2: memref<1xi32, #tpu.memory_space<smem>>) -> (i32, i32, i32, i32) {
    %c0_i32 = arith.constant 0 : i32
    %c0_i32_0 = arith.constant 0 : i32
    %c0_i32_1 = arith.constant 0 : i32
    return %arg0, %arg1, %c0_i32, %c0_i32_0 : i32, i32, i32, i32
  }
  func.func @transform_1(%arg0: i32, %arg1: i32, %arg2: memref<1xi32, #tpu.memory_space<smem>>) -> (i32, i32) {
    %c0_i32 = arith.constant 0 : i32
    %c0_i32_0 = arith.constant 0 : i32
    %c0_i32_1 = arith.constant 0 : i32
    return %c0_i32, %c0_i32_0 : i32, i32
  }
  func.func @transform_2(%arg0: i32, %arg1: i32, %arg2: memref<1xi32, #tpu.memory_space<smem>>) -> (i32, i32) {
    %c0_i32 = arith.constant 0 : i32
    %c0_i32_0 = arith.constant 0 : i32
    %c0_i32_1 = arith.constant 0 : i32
    return %c0_i32, %c0_i32_0 : i32, i32
  }
  func.func @transform_3(%arg0: i32, %arg1: i32, %arg2: memref<1xi32, #tpu.memory_space<smem>>) -> (i32, i32, i32) {
    %c0_i32 = arith.constant 0 : i32
    %c0_i32_0 = arith.constant 0 : i32
    return %arg0, %c0_i32, %arg1 : i32, i32, i32
  }
  func.func @transform_4(%arg0: i32, %arg1: i32, %arg2: memref<1xi32, #tpu.memory_space<smem>>) -> (i32, i32, i32) {
    %c0_i32 = arith.constant 0 : i32
    %c0_i32_0 = arith.constant 0 : i32
    return %arg0, %c0_i32, %arg1 : i32, i32, i32
  }
  func.func @transform_5(%arg0: i32, %arg1: i32, %arg2: memref<1xi32, #tpu.memory_space<smem>>) -> (i32, i32, i32) {
    %c0_i32 = arith.constant 0 : i32
    %c0_i32_0 = arith.constant 0 : i32
    return %arg0, %c0_i32, %arg1 : i32, i32, i32
  }
}

</mosaic_0001>

<llo_original>
// kernel: tpu_custom_call.1
$region0: #{tpu_custom_call.1}
  #allocation0 [shape = 'u32[]', space=smem, size = 0x4, offset = 0x4, fixed_abs, tag = 'smem constant byte address 0x4 - core index']
  #allocation1 [shape = 'u32[144,128]{1,0:T(1,128)}', space=vmem, size = 0x12000, scoped, tag = 'internal scratch']
  #allocation2 [shape = 'f32[8,1]{1,0:T(8,128)}', space=vmem, size = 0x1000, scoped, tag = 'scratch operand']
  #allocation3 [shape = 's32[1]{0}', space=sflag, size = 0x4, scoped, tag = 'scoped memory for tpu_custom_call.1']
  #allocation4 [shape = 's32[1]{0:T(128)S(6)}', space=smem, size = 0x200, scoped, tag = 'prefetched SMEM operand 0']
  %s0 = inlined_call_operand.<no memory space> [shape: s32[1], index: 0, kind: input, shape index: {}]
  %s1 = inlined_call_operand.vmem [shape: f32[2,3,17,16], index: 1, kind: input, shape index: {}]
  %s2 = inlined_call_operand.vmem [shape: f32[16,512], index: 2, kind: input, shape index: {}]
  %s3 = inlined_call_operand.vmem [shape: f32[1,512], index: 3, kind: input, shape index: {}]
  %s4 = inlined_call_operand.hbm [shape: f32[2,8,1536], index: 4, kind: output, shape index: {0}]
  %s5 = inlined_call_operand.hbm [shape: f32[2,1,1536], index: 5, kind: output, shape index: {1}]
  %s6 = inlined_call_operand.hbm [shape: f32[2,8,1536], index: 6, kind: output, shape index: {2}]
  %7 = xla_tuple %s4, %s5, %s6
  %s8 = sld [smem:[#allocation0]]
  $region65: #{tpu_custom_call.1} parent=0
    _
  %s10 = ssub.s32 1, %s8
  %s11 = scalar_select 0, %s10, %s8
  %12 = sst [smem:[#allocation4]] %s0
  $region1: #{tpu_custom_call.1} parent=0
    #allocation5 [shape = 'u8[32768]{0}', space=vmem, size = 0x8000, scoped, tag = 'output window, operand 0']
    #allocation6 [shape = 's32[2]{0}', space=sflag, size = 0x8, scoped, tag = 'scoped memory for tpu_custom_call.1']
    #allocation7 [shape = 'u8[4096]{0}', space=vmem, size = 0x1000, scoped, tag = 'output window, operand 1']
    #allocation8 [shape = 's32[2]{0}', space=sflag, size = 0x8, scoped, tag = 'scoped memory for tpu_custom_call.1']
    #allocation9 [shape = 'u8[32768]{0}', space=vmem, size = 0x8000, scoped, tag = 'output window, operand 2']
    %13 = vsyncpa [#allocation6], 0
    %s14 = scalar_lea.sflag [#allocation6], 1
    %15 = vsyncpa %s14, 0
    %16 = vsyncpa [#allocation8], 0
    %s17 = scalar_lea.sflag [#allocation8], 1
    %18 = vsyncpa %s17, 0
    loop: start=0, step=1, limit=8
    $region2: #{tpu_custom_call.1} parent=1 // loop_pre_header
      _
    $region3: #{tpu_custom_call.1} parent=1 // loop_header
      %s20 = sphi 0, %s24
      %p21 = scmp.ge.s32.totalorder %s20, 8
      %s27 = sphi 0, %s39
      %s28 = sphi 0, %s35
      %s29 = sphi 0, %s27
      %s30 = sphi 0, %s28
      %s31 = sphi 0, %s29
      %s32 = sphi 0, %s30
      %s44 = sphi 0, %s46
      %s47 = sphi 0, %s44
      %s48 = sphi 0, %s47
      %s64 = sphi 0, %s48
      %s68 = sphi 0, %s68
      %s70 = sphi 0, %s68
      %s71 = sphi 0, %s70
      %s85 = sphi 0, %s71
      %s89 = sphi 0, %s89
      %s91 = sphi 0, %s89
      %s92 = sphi 0, %s91
      %s106 = sphi 0, %s92
      %s114 = sphi 0, %s116
      %s117 = sphi 0, %s114
      %s118 = sphi 0, %s117
      %s134 = sphi 0, %s118
      %s142 = sphi 0, %s144
      %s145 = sphi 0, %s142
      %s146 = sphi 0, %s145
      %s162 = sphi 0, %s146
      %s170 = sphi 0, %s172
      %s173 = sphi 0, %s170
      %s174 = sphi 0, %s173
      %s190 = sphi 0, %s174
    $region4: #{tpu_custom_call.1} parent=1 // loop_header_branch
      %23 = sbr.rel (%p21) target = $region8
    $region5: #{tpu_custom_call.1} parent=1 // loop_body
      %s25 = ssub.s32 %s20, 1
      %s26 = ssub.s32 %s20, 2
      %s33 = sadd.s32 1, %s28
      %p34 = scmp.ge.s32.totalorder %s33, 3
      %s35 = scalar_select %p34, 0, %s33
      %s36 = sadd.s32 1, %s27
      %s37 = scalar_select %p34, %s36, %s27
      %p38 = scmp.ge.s32.totalorder %s37, 2
      %s39 = scalar_select %p38, 0, %s37
      %s40 = ssub.s32 %s27, %s39
      %s41 = ssub.s32 %s28, %s35
      %s42 = sor.u32 %s40, %s41
      %p43 = scmp.eq.s32.totalorder %s42, 0
      %s45 = sadd.s32 %s44, 1
      %s46 = scalar_select %p43, %s44, %s45
      %p49 = pneg %p43
      %p50 = scmp.eq.s32.totalorder %s20, 5
      %p51 = por %p49, %p50
      %p52 = scmp.ne.s32.totalorder %s44, %s47
      %p53 = scmp.eq.s32.totalorder %s20, 0
      %p54 = por %p52, %p53
      %p55 = scmp.ne.s32.totalorder %s44, %s47
      %p56 = scmp.eq.s32.totalorder %s25, 5
      %p57 = por %p55, %p56
      %p58 = scmp.ne.s32.totalorder %s47, %s48
      %p59 = scmp.eq.s32.totalorder %s25, 0
      %p60 = por %p58, %p59
      %p61 = scmp.ne.s32.totalorder %s47, %s48
      %p62 = scmp.eq.s32.totalorder %s26, 5
      %p63 = por %p61, %p62
      %p65 = scmp.ne.s32.totalorder %s48, %s64
      %p66 = scmp.eq.s32.totalorder %s26, 0
      %p67 = por %p65, %p66
      %s69 = sadd.s32 %s68, 1
      %p72 = scmp.eq.s32.totalorder %s20, 5
      %p73 = scmp.ne.s32.totalorder %s68, %s70
      %p74 = scmp.eq.s32.totalorder %s20, 0
      %p75 = por %p73, %p74
      %p76 = scmp.ne.s32.totalorder %s68, %s70
      %p77 = scmp.eq.s32.totalorder %s25, 5
      %p78 = por %p76, %p77
      %p79 = scmp.ne.s32.totalorder %s70, %s71
      %p80 = scmp.eq.s32.totalorder %s25, 0
      %p81 = por %p79, %p80
      %p82 = scmp.ne.s32.totalorder %s70, %s71
      %p83 = scmp.eq.s32.totalorder %s26, 5
      %p84 = por %p82, %p83
      %p86 = scmp.ne.s32.totalorder %s71, %s85
      %p87 = scmp.eq.s32.totalorder %s26, 0
      %p88 = por %p86, %p87
      %s90 = sadd.s32 %s89, 1
      %p93 = scmp.eq.s32.totalorder %s20, 5
      %p94 = scmp.ne.s32.totalorder %s89, %s91
      %p95 = scmp.eq.s32.totalorder %s20, 0
      %p96 = por %p94, %p95
      %p97 = scmp.ne.s32.totalorder %s89, %s91
      %p98 = scmp.eq.s32.totalorder %s25, 5
      %p99 = por %p97, %p98
      %p100 = scmp.ne.s32.totalorder %s91, %s92
      %p101 = scmp.eq.s32.totalorder %s25, 0
      %p102 = por %p100, %p101
      %p103 = scmp.ne.s32.totalorder %s91, %s92
      %p104 = scmp.eq.s32.totalorder %s26, 5
      %p105 = por %p103, %p104
      %p107 = scmp.ne.s32.totalorder %s92, %s106
      %p108 = scmp.eq.s32.totalorder %s26, 0
      %p109 = por %p107, %p108
      %s110 = ssub.s32 %s27, %s39
      %s111 = ssub.s32 %s28, %s35
      %s112 = sor.u32 %s110, %s111
      %p113 = scmp.eq.s32.totalorder %s112, 0
      %s115 = sadd.s32 %s114, 1
      %s116 = scalar_select %p113, %s114, %s115
      %p119 = pneg %p113
      %p120 = scmp.eq.s32.totalorder %s20, 5
      %p121 = por %p119, %p120
      %p122 = scmp.ne.s32.totalorder %s114, %s117
      %p123 = scmp.eq.s32.totalorder %s20, 0
      %p124 = por %p122, %p123
      %p125 = scmp.ne.s32.totalorder %s114, %s117
      %p126 = scmp.eq.s32.totalorder %s25, 5
      %p127 = por %p125, %p126
      %p128 = scmp.ne.s32.totalorder %s117, %s118
      %p129 = scmp.eq.s32.totalorder %s25, 0
      %p130 = por %p128, %p129
      %p131 = scmp.ne.s32.totalorder %s117, %s118
      %p132 = scmp.eq.s32.totalorder %s26, 5
      %p133 = por %p131, %p132
      %p135 = scmp.ne.s32.totalorder %s118, %s134
      %p136 = scmp.eq.s32.totalorder %s26, 0
      %p137 = por %p135, %p136
      %s138 = ssub.s32 %s27, %s39
      %s139 = ssub.s32 %s28, %s35
      %s140 = sor.u32 %s138, %s139
      %p141 = scmp.eq.s32.totalorder %s140, 0
      %s143 = sadd.s32 %s142, 1
      %s144 = scalar_select %p141, %s142, %s143
      %p147 = pneg %p141
      %p148 = scmp.eq.s32.totalorder %s20, 5
      %p149 = por %p147, %p148
      %p150 = scmp.ne.s32.totalorder %s142, %s145
      %p151 = scmp.eq.s32.totalorder %s20, 0
      %p152 = por %p150, %p151
      %p153 = scmp.ne.s32.totalorder %s142, %s145
      %p154 = scmp.eq.s32.totalorder %s25, 5
      %p155 = por %p153, %p154
      %p156 = scmp.ne.s32.totalorder %s145, %s146
      %p157 = scmp.eq.s32.totalorder %s25, 0
      %p158 = por %p156, %p157
      %p159 = scmp.ne.s32.totalorder %s145, %s146
      %p160 = scmp.eq.s32.totalorder %s26, 5
      %p161 = por %p159, %p160
      %p163 = scmp.ne.s32.totalorder %s146, %s162
      %p164 = scmp.eq.s32.totalorder %s26, 0
      %p165 = por %p163, %p164
      %s166 = ssub.s32 %s27, %s39
      %s167 = ssub.s32 %s28, %s35
      %s168 = sor.u32 %s166, %s167
      %p169 = scmp.eq.s32.totalorder %s168, 0
      %s171 = sadd.s32 %s170, 1
      %s172 = scalar_select %p169, %s170, %s171
      %p175 = pneg %p169
      %p176 = scmp.eq.s32.totalorder %s20, 5
      %p177 = por %p175, %p176
      %p178 = scmp.ne.s32.totalorder %s170, %s173
      %p179 = scmp.eq.s32.totalorder %s20, 0
      %p180 = por %p178, %p179
      %p181 = scmp.ne.s32.totalorder %s170, %s173
      %p182 = scmp.eq.s32.totalorder %s25, 5
      %p183 = por %p181, %p182
      %p184 = scmp.ne.s32.totalorder %s173, %s174
      %p185 = scmp.eq.s32.totalorder %s25, 0
      %p186 = por %p184, %p185
      %p187 = scmp.ne.s32.totalorder %s173, %s174
      %p188 = scmp.eq.s32.totalorder %s26, 5
      %p189 = por %p187, %p188
      %p191 = scmp.ne.s32.totalorder %s174, %s190
      %p192 = scmp.eq.s32.totalorder %s26, 0
      %p193 = por %p191, %p192
      %p194 = scmp.le.s32.totalorder 1, %s20
      %p195 = scmp.lt.s32.totalorder %s20, 7
      %p196 = pnand %p194, %p195
      %p197 = pneg %p196
      // Predicated region
      $region9: #{tpu_custom_call.1} parent=5 // pred_check
        _
      $region10: #{tpu_custom_call.1} parent=5 // pred_check_branch
        %199 = sbr.rel (%p196) target = $region12
      $region11: #{tpu_custom_call.1} parent=5 // pred_region
        %s200 = ssub.s32 %s20, 1
        // Predicated region
        $region13: #{tpu_custom_call.1} parent=11 // pred_check
          %p201 = pneg %p81
        $region14: #{tpu_custom_call.1} parent=11 // pred_check_branch
          %203 = sbr.rel (%p201) target = $region16
        $region15: #{tpu_custom_call.1} parent=11 // pred_region
          _
        $region16: #{tpu_custom_call.1} parent=11 // pred_fallthru
          _
        // Predicated region
        $region17: #{tpu_custom_call.1} parent=11 // pred_check
          %p204 = pneg %p102
        $region18: #{tpu_custom_call.1} parent=11 // pred_check_branch
          %206 = sbr.rel (%p204) target = $region20
        $region19: #{tpu_custom_call.1} parent=11 // pred_region
          _
        $region20: #{tpu_custom_call.1} parent=11 // pred_fallthru
          _
      $region12: #{tpu_custom_call.1} parent=5 // pred_fallthru
        _
      %p207 = scmp.lt.s32.totalorder %s20, 6
      // Predicated region
      $region21: #{tpu_custom_call.1} parent=5 // pred_check
        %p208 = pneg %p207
      $region22: #{tpu_custom_call.1} parent=5 // pred_check_branch
        %210 = sbr.rel (%p208) target = $region24
      $region23: #{tpu_custom_call.1} parent=5 // pred_region
        // Predicated region
        $region25: #{tpu_custom_call.1} parent=23 // pred_check
          %p211 = pneg %p54
        $region26: #{tpu_custom_call.1} parent=23 // pred_check_branch
          %213 = sbr.rel (%p211) target = $region28
        $region27: #{tpu_custom_call.1} parent=23 // pred_region
          %p214 = scmp.lt.s32.totalorder %s27, 1
          %s215 = scalar_select %p214, %s27, 1
          %p216 = scmp.lt.s32.totalorder %s28, 2
          %s217 = scalar_select %p216, %s28, 2
          %s218 = smul.addr %s217, 3
          %s219 = smul.addr %s215, 9
          %s220 = sadd.s32 %s218, %s219
          %s221 = smul.addr %s220, 8
          %s222 = scalar_lea.vmem %s1, %s221
        $region28: #{tpu_custom_call.1} parent=23 // pred_fallthru
          _
      $region24: #{tpu_custom_call.1} parent=5 // pred_fallthru
        _
      %p223 = scmp.le.s32.totalorder 1, %s20
      %p224 = scmp.lt.s32.totalorder %s20, 7
      %p225 = pnand %p223, %p224
      %p226 = pneg %p225
      // Predicated region
      $region29: #{tpu_custom_call.1} parent=5 // pred_check
        _
      $region30: #{tpu_custom_call.1} parent=5 // pred_check_branch
        %228 = sbr.rel (%p225) target = $region32
      $region31: #{tpu_custom_call.1} parent=5 // pred_region
        %s229 = ssub.s32 %s20, 1
        %p230 = scmp.lt.s32.totalorder %s29, 1
        %s231 = scalar_select %p230, %s29, 1
        %p232 = scmp.lt.s32.totalorder %s30, 2
        %s233 = scalar_select %p232, %s30, 2
        %s234 = smul.addr %s233, 3
        %s235 = smul.addr %s231, 9
        %s236 = sadd.s32 %s234, %s235
        %s237 = smul.addr %s236, 8
        %s238 = scalar_lea.vmem %s1, %s237
        %p239 = pneg %p60
        %p240 = pneg %p57
        %p241 = pneg %p81
        %p242 = pneg %p78
        %p243 = pneg %p102
        %p244 = pneg %p99
        %p245 = pneg %p130
        %p246 = pneg %p127
        %s247 = sand.u32 %s117, 1
        %s248 = scalar_lea.sflag [#allocation6], %s247
        %s249 = sand.u32 %s117, 1
        %s250 = smul.addr %s249, 32
        %s251 = scalar_lea.vmem [#allocation5], %s250
        %p252 = pneg %p158
        %p253 = pneg %p155
        %s254 = sand.u32 %s25, 1
        %s255 = scalar_lea.sflag [#allocation8], %s254
        %s256 = sand.u32 %s145, 1
        %s257 = smul.addr %s256, 4
        %s258 = scalar_lea.vmem [#allocation7], %s257
        %p259 = pneg %p186
        %p260 = pneg %p183
        %s261 = sand.u32 %s25, 1
        %s262 = scalar_lea.sflag [#allocation8], %s261
        %s263 = sand.u32 %s173, 1
        %s264 = smul.addr %s263, 32
        %s265 = scalar_lea.vmem [#allocation9], %s264
        %p266 = scmp.lt.s32.totalorder %s29, 1
        %s267 = scalar_select %p266, %s29, 1
        %p268 = scmp.lt.s32.totalorder %s30, 2
        %s269 = scalar_select %p268, %s30, 2
        %s270 = smul.addr %s269, 3
        %s271 = smul.addr %s267, 9
        %s272 = sadd.s32 %s270, %s271
        %s273 = smul.addr %s272, 8
        %s274 = scalar_lea.vmem %s1, %s273
        %s275 = smul.u32 4, %s30
        %s276 = smul.u32 4, %s30
        %s277 = smul.u32 4, %s30
        %p278 = scmp.eq.s32.totalorder %s30, 0
        // Predicated region
        $region33: #{tpu_custom_call.1} parent=31 // pred_check
          %p279 = pneg %p278
        $region34: #{tpu_custom_call.1} parent=31 // pred_check_branch
          %281 = sbr.rel (%p279) target = $region36
        $region35: #{tpu_custom_call.1} parent=31 // pred_region
          %vm282 = vcmask 7168
          %283 = vst.msk [vmem:[#allocation2] sm:$0xff] %vm282, 0.0
        $region36: #{tpu_custom_call.1} parent=31 // pred_fallthru
          _
        %v284 = vld [vmem:[%s274] sm:$0xff]
        %v285 = vld [vmem:[%s274 + $0x8] sm:$0xff]
        %v286 = vld [vmem:[%s274 + $0x10] sm:$0x1]
        %v287 = vld [vmem:[%s2] sm:$0xff]
        %v288 = vld [vmem:[%s2 + $0x8] sm:$0xff]
        %v289 = vld [vmem:[%s2 + $0x10] sm:$0xff]
        %v290 = vld [vmem:[%s2 + $0x18] sm:$0xff]
        %v291 = vld [vmem:[%s2 + $0x20] sm:$0xff]
        %v292 = vld [vmem:[%s2 + $0x28] sm:$0xff]
        %v293 = vld [vmem:[%s2 + $0x30] sm:$0xff]
        %v294 = vld [vmem:[%s2 + $0x38] sm:$0xff]
        %vm295 = vcmask 130048
        %v297 = vsel %vm295, %v284, 0
        %v300 = vsel %vm295, %v285, 0
        %v303 = vsel %vm295, %v286, 0
        %v305 = vand.u32 %v288, 4294901760
        %306 = vmatprep.subr.mxu0 %v305
        %v307 = vand.u32 %v287, 4294901760
        %308 = vmatpush1.msra.mxu0 %v307
        %v309 = vand.u32 %v292, 4294901760
        %310 = vmatprep.subr.mxu0 %v309
        %v311 = vand.u32 %v291, 4294901760
        %312 = vmatpush1.msra.mxu0 %v311
        %313 = vmatprep.subr.mxu0 0.0
        %314 = vmatpush1.msra.mxu0 0.0
        %315 = vmatprep.subr.mxu0 0.0
        %316 = vmatpush1.msra.mxu0 0.0
        %317 = vmatprep.subr.mxu0 0.0
        %318 = vmatpush1.msra.mxu0 0.0
        %319 = vmatprep.subr.mxu0 0.0
        %320 = vmatpush1.msra.mxu0 0.0
        %321 = vmatprep.subr.mxu0 0.0
        %322 = vmatpush1.msra.mxu0 0.0
        %323 = vmatprep.subr.mxu0 0.0
        %324 = vmatpush1.msra.mxu0 0.0
        %325 = vmatprep.subr.mxu0 0.0
        %326 = vmatpush1.msra.mxu0 0.0
        %327 = vmatprep.subr.mxu0 0.0
        %328 = vmatpush1.msra.mxu0 0.0
        %329 = vmatprep.subr.mxu0 0.0
        %330 = vmatpush1.msra.mxu0 0.0
        %331 = vmatprep.subr.mxu0 0.0
        %332 = vmatpush1.msra.mxu0 0.0
        %333 = vmatprep.subr.mxu0 0.0
        %334 = vmatpush1.msra.mxu0 0.0
        %335 = vmatprep.subr.mxu0 0.0
        %336 = vmatpush1.msra.mxu0 0.0
        %337 = vmatprep.subr.mxu0 0.0
        %338 = vmatpush1.msra.mxu0 0.0
        %339 = vmatprep.subr.mxu0 0.0
        %340 = vmatpush1.msra.mxu0 0.0
        %341 = vmatprep.subr.mxu0 0.0
        %342 = vmatpush1.msra.mxu0 0.0
        %343 = vmatprep.subr.mxu0 0.0
        %344 = vmatpush1.msra.mxu0 0.0
        %345 = vmatprep.subr.mxu0 0.0
        %346 = vmatpush1.msra.mxu0 0.0
        %347 = vmatprep.subr.mxu0 0.0
        %348 = vmatpush1.msra.mxu0 0.0
        %349 = vmatprep.subr.mxu0 0.0
        %350 = vmatpush1.msra.mxu0 0.0
        %351 = vmatprep.subr.mxu0 0.0
        %352 = vmatpush1.msra.mxu0 0.0
        %353 = vmatprep.subr.mxu0 0.0
        %354 = vmatpush1.msra.mxu0 0.0
        %355 = vmatprep.subr.mxu0 0.0
        %356 = vmatpush1.msra.mxu0 0.0
        %357 = vmatprep.subr.mxu0 0.0
        %358 = vmatpush1.msra.mxu0 0.0
        %359 = vmatprep.subr.mxu0 0.0
        %360 = vmatpush1.msra.mxu0 0.0
        %361 = vmatprep.subr.mxu0 0.0
        %362 = vmatpush1.msra.mxu0 0.0
        %363 = vmatprep.subr.mxu0 0.0
        %364 = vmatpush1.msra.mxu0 0.0
        %365 = vmatprep.subr.mxu0 0.0
        %366 = vmatpush1.msra.mxu0 0.0
        %367 = vmatprep.subr.mxu0 0.0
        %368 = vmatpush1.msra.mxu0 0.0
        %369 = vmatprep.subr.mxu0 0.0
        %370 = vmatpush1.msra.mxu0 0.0
        %371 = vmatprep.subr.mxu0 0.0
        %372 = vmatpush1.msra.mxu0 0.0
        %373 = vmatprep.mubr.f32.mxu0 0.0
        %v374 = vand.u32 %v297, 4294901760
        %v375 = vsub.f32 %v297, %v374
        %v376 = vand.u32 %v375, 4294901760
        %v377 = vsub.f32 %v375, %v376
        %v378 = vand.u32 %v377, 4294901760
        %379 = vmatmul.mubr.f32.gmra.mrb[0].mxu0 %v378
        %v380 = vpop.f32.mrb[0].mxu0
        %v381 = vadd.f32 0.0, %v380
        %v382 = vpop.f32.mrb[0].mxu0
        %v383 = vadd.f32 0.0, %v382
        %384 = vmatprep.mubr.f32.mxu0 0.0
        %v385 = vand.u32 %v300, 4294901760
        %v386 = vsub.f32 %v300, %v385
        %v387 = vand.u32 %v386, 4294901760
        %v388 = vsub.f32 %v386, %v387
        %v389 = vand.u32 %v388, 4294901760
        %390 = vmatmul.mubr.f32.gmra.mrb[0].mxu0 %v389
        %v391 = vpop.f32.mrb[0].mxu0
        %v392 = vadd.f32 0.0, %v391
        %v393 = vpop.f32.mrb[0].mxu0
        %v394 = vadd.f32 0.0, %v393
        %395 = vmatprep.mubr.f32.mxu0 0.0
        %v396 = vand.u32 %v303, 4294901760
        %v397 = vsub.f32 %v303, %v396
        %v398 = vand.u32 %v397, 4294901760
        %v399 = vsub.f32 %v397, %v398
        %v400 = vand.u32 %v399, 4294901760
        %401 = vmatmul.mubr.f32.gmra.mrb[0].mxu0 %v400
        %v402 = vpop.f32.mrb[0].mxu0
        %v403 = vadd.f32 0.0, %v402
        %v404 = vpop.f32.mrb[0].mxu0
        %v405 = vadd.f32 0.0, %v404
        %406 = vdwg.mxu0
        %v407 = vand.u32 %v288, 4294901760
        %v408 = vsub.f32 %v288, %v407
        %v409 = vand.u32 %v408, 4294901760
        %v410 = vsub.f32 %v408, %v409
        %v411 = vand.u32 %v410, 4294901760
        %412 = vmatprep.subr.mxu0 %v411
        %v413 = vand.u32 %v287, 4294901760
        %v414 = vsub.f32 %v287, %v413
        %v415 = vand.u32 %v414, 4294901760
        %v416 = vsub.f32 %v414, %v415
        %v417 = vand.u32 %v416, 4294901760
        %418 = vmatpush1.msra.mxu0 %v417
        %v419 = vand.u32 %v292, 4294901760
        %v420 = vsub.f32 %v292, %v419
        %v421 = vand.u32 %v420, 4294901760
        %v422 = vsub.f32 %v420, %v421
        %v423 = vand.u32 %v422, 4294901760
        %424 = vmatprep.subr.mxu0 %v423
        %v425 = vand.u32 %v291, 4294901760
        %v426 = vsub.f32 %v291, %v425
        %v427 = vand.u32 %v426, 4294901760
        %v428 = vsub.f32 %v426, %v427
        %v429 = vand.u32 %v428, 4294901760
        %430 = vmatpush1.msra.mxu0 %v429
        %431 = vmatprep.subr.mxu0 0.0
        %432 = vmatpush1.msra.mxu0 0.0
        %433 = vmatprep.subr.mxu0 0.0
        %434 = vmatpush1.msra.mxu0 0.0
        %435 = vmatprep.subr.mxu0 0.0
        %436 = vmatpush1.msra.mxu0 0.0
        %437 = vmatprep.subr.mxu0 0.0
        %438 = vmatpush1.msra.mxu0 0.0
        %439 = vmatprep.subr.mxu0 0.0
        %440 = vmatpush1.msra.mxu0 0.0
        %441 = vmatprep.subr.mxu0 0.0
        %442 = vmatpush1.msra.mxu0 0.0
        %443 = vmatprep.subr.mxu0 0.0
        %444 = vmatpush1.msra.mxu0 0.0
        %445 = vmatprep.subr.mxu0 0.0
        %446 = vmatpush1.msra.mxu0 0.0
        %447 = vmatprep.subr.mxu0 0.0
        %448 = vmatpush1.msra.mxu0 0.0
        %449 = vmatprep.subr.mxu0 0.0
        %450 = vmatpush1.msra.mxu0 0.0
        %451 = vmatprep.subr.mxu0 0.0
        %452 = vmatpush1.msra.mxu0 0.0
        %453 = vmatprep.subr.mxu0 0.0
        %454 = vmatpush1.msra.mxu0 0.0
        %455 = vmatprep.subr.mxu0 0.0
        %456 = vmatpush1.msra.mxu0 0.0
        %457 = vmatprep.subr.mxu0 0.0
        %458 = vmatpush1.msra.mxu0 0.0
        %459 = vmatprep.subr.mxu0 0.0
        %460 = vmatpush1.msra.mxu0 0.0
        %461 = vmatprep.subr.mxu0 0.0
        %462 = vmatpush1.msra.mxu0 0.0
        %463 = vmatprep.subr.mxu0 0.0
        %464 = vmatpush1.msra.mxu0 0.0
        %465 = vmatprep.subr.mxu0 0.0
        %466 = vmatpush1.msra.mxu0 0.0
        %467 = vmatprep.subr.mxu0 0.0
        %468 = vmatpush1.msra.mxu0 0.0
        %469 = vmatprep.subr.mxu0 0.0
        %470 = vmatpush1.msra.mxu0 0.0
        %471 = vmatprep.subr.mxu0 0.0
        %472 = vmatpush1.msra.mxu0 0.0
        %473 = vmatprep.subr.mxu0 0.0
        %474 = vmatpush1.msra.mxu0 0.0
        %475 = vmatprep.subr.mxu0 0.0
        %476 = vmatpush1.msra.mxu0 0.0
        %477 = vmatprep.subr.mxu0 0.0
        %478 = vmatpush1.msra.mxu0 0.0
        %479 = vmatprep.subr.mxu0 0.0
        %480 = vmatpush1.msra.mxu0 0.0
        %481 = vmatprep.subr.mxu0 0.0
        %482 = vmatpush1.msra.mxu0 0.0
        %483 = vmatprep.subr.mxu0 0.0
        %484 = vmatpush1.msra.mxu0 0.0
        %485 = vmatprep.subr.mxu0 0.0
        %486 = vmatpush1.msra.mxu0 0.0
        %487 = vmatprep.subr.mxu0 0.0
        %488 = vmatpush1.msra.mxu0 0.0
        %489 = vmatprep.subr.mxu0 0.0
        %490 = vmatpush1.msra.mxu0 0.0
        %491 = vmatprep.mubr.f32.mxu0 0.0
        %v492 = vand.u32 %v297, 4294901760
        %493 = vmatmul.mubr.f32.gmra.mrb[0].mxu0 %v492
        %v494 = vpop.f32.mrb[0].mxu0
        %v495 = vadd.f32 %v381, %v494
        %v496 = vpop.f32.mrb[0].mxu0
        %v497 = vadd.f32 %v383, %v496
        %498 = vmatprep.mubr.f32.mxu0 0.0
        %v499 = vand.u32 %v300, 4294901760
        %500 = vmatmul.mubr.f32.gmra.mrb[0].mxu0 %v499
        %v501 = vpop.f32.mrb[0].mxu0
        %v502 = vadd.f32 %v392, %v501
        %v503 = vpop.f32.mrb[0].mxu0
        %v504 = vadd.f32 %v394, %v503
        %505 = vmatprep.mubr.f32.mxu0 0.0
        %v506 = vand.u32 %v303, 4294901760
        %507 = vmatmul.mubr.f32.gmra.mrb[0].mxu0 %v506
        %v508 = vpop.f32.mrb[0].mxu0
        %v509 = vadd.f32 %v403, %v508
        %v510 = vpop.f32.mrb[0].mxu0
        %v511 = vadd.f32 %v405, %v510
        %512 = vdwg.mxu0
        %v513 = vand.u32 %v288, 4294901760
        %v514 = vsub.f32 %v288, %v513
        %515 = vmatprep.subr.mxu0 %v514
        %v516 = vand.u32 %v287, 4294901760
        %v517 = vsub.f32 %v287, %v516
        %518 = vmatpush1.msra.mxu0 %v517
        %v519 = vand.u32 %v292, 4294901760
        %v520 = vsub.f32 %v292, %v519
        %521 = vmatprep.subr.mxu0 %v520
        %v522 = vand.u32 %v291, 4294901760
        %v523 = vsub.f32 %v291, %v522
        %524 = vmatpush1.msra.mxu0 %v523
        %525 = vmatprep.subr.mxu0 0.0
        %526 = vmatpush1.msra.mxu0 0.0
        %527 = vmatprep.subr.mxu0 0.0
        %528 = vmatpush1.msra.mxu0 0.0
        %529 = vmatprep.subr.mxu0 0.0
        %530 = vmatpush1.msra.mxu0 0.0
        %531 = vmatprep.subr.mxu0 0.0
        %532 = vmatpush1.msra.mxu0 0.0
        %533 = vmatprep.subr.mxu0 0.0
        %534 = vmatpush1.msra.mxu0 0.0
        %535 = vmatprep.subr.mxu0 0.0
        %536 = vmatpush1.msra.mxu0 0.0
        %537 = vmatprep.subr.mxu0 0.0
        %538 = vmatpush1.msra.mxu0 0.0
        %539 = vmatprep.subr.mxu0 0.0
        %540 = vmatpush1.msra.mxu0 0.0
        %541 = vmatprep.subr.mxu0 0.0
        %542 = vmatpush1.msra.mxu0 0.0
        %543 = vmatprep.subr.mxu0 0.0
        %544 = vmatpush1.msra.mxu0 0.0
        %545 = vmatprep.subr.mxu0 0.0
        %546 = vmatpush1.msra.mxu0 0.0
        %547 = vmatprep.subr.mxu0 0.0
        %548 = vmatpush1.msra.mxu0 0.0
        %549 = vmatprep.subr.mxu0 0.0
        %550 = vmatpush1.msra.mxu0 0.0
        %551 = vmatprep.subr.mxu0 0.0
        %552 = vmatpush1.msra.mxu0 0.0
        %553 = vmatprep.subr.mxu0 0.0
        %554 = vmatpush1.msra.mxu0 0.0
        %555 = vmatprep.subr.mxu0 0.0
        %556 = vmatpush1.msra.mxu0 0.0
        %557 = vmatprep.subr.mxu0 0.0
        %558 = vmatpush1.msra.mxu0 0.0
        %559 = vmatprep.subr.mxu0 0.0
        %560 = vmatpush1.msra.mxu0 0.0
        %561 = vmatprep.subr.mxu0 0.0
        %562 = vmatpush1.msra.mxu0 0.0
        %563 = vmatprep.subr.mxu0 0.0
        %564 = vmatpush1.msra.mxu0 0.0
        %565 = vmatprep.subr.mxu0 0.0
        %566 = vmatpush1.msra.mxu0 0.0
        %567 = vmatprep.subr.mxu0 0.0
        %568 = vmatpush1.msra.mxu0 0.0
        %569 = vmatprep.subr.mxu0 0.0
        %570 = vmatpush1.msra.mxu0 0.0
        %571 = vmatprep.subr.mxu0 0.0
        %572 = vmatpush1.msra.mxu0 0.0
        %573 = vmatprep.subr.mxu0 0.0
        %574 = vmatpush1.msra.mxu0 0.0
        %575 = vmatprep.subr.mxu0 0.0
        %576 = vmatpush1.msra.mxu0 0.0
        %577 = vmatprep.subr.mxu0 0.0
        %578 = vmatpush1.msra.mxu0 0.0
        %579 = vmatprep.subr.mxu0 0.0
        %580 = vmatpush1.msra.mxu0 0.0
        %581 = vmatprep.subr.mxu0 0.0
        %582 = vmatpush1.msra.mxu0 0.0
        %583 = vmatprep.subr.mxu0 0.0
        %584 = vmatpush1.msra.mxu0 0.0
        %585 = vmatprep.mubr.f32.mxu0 0.0
        %v586 = vand.u32 %v297, 4294901760
        %v587 = vsub.f32 %v297, %v586
        %588 = vmatmul.mubr.f32.gmra.mrb[0].mxu0 %v587
        %v589 = vpop.f32.mrb[0].mxu0
        %v590 = vadd.f32 %v495, %v589
        %v591 = vpop.f32.mrb[0].mxu0
        %v592 = vadd.f32 %v497, %v591
        %593 = vmatprep.mubr.f32.mxu0 0.0
        %v594 = vand.u32 %v300, 4294901760
        %v595 = vsub.f32 %v300, %v594
        %596 = vmatmul.mubr.f32.gmra.mrb[0].mxu0 %v595
        %v597 = vpop.f32.mrb[0].mxu0
        %v598 = vadd.f32 %v502, %v597
        %v599 = vpop.f32.mrb[0].mxu0
        %v600 = vadd.f32 %v504, %v599
        %601 = vmatprep.mubr.f32.mxu0 0.0
        %v602 = vand.u32 %v303, 4294901760
        %v603 = vsub.f32 %v303, %v602
        %604 = vmatmul.mubr.f32.gmra.mrb[0].mxu0 %v603
        %v605 = vpop.f32.mrb[0].mxu0
        %v606 = vadd.f32 %v509, %v605
        %v607 = vpop.f32.mrb[0].mxu0
        %v608 = vadd.f32 %v511, %v607
        %609 = vdwg.mxu0
        %v610 = vand.u32 %v288, 4294901760
        %611 = vmatprep.subr.mxu0 %v610
        %v612 = vand.u32 %v287, 4294901760
        %613 = vmatpush1.msra.mxu0 %v612
        %v614 = vand.u32 %v292, 4294901760
        %615 = vmatprep.subr.mxu0 %v614
        %v616 = vand.u32 %v291, 4294901760
        %617 = vmatpush1.msra.mxu0 %v616
        %618 = vmatprep.subr.mxu0 0.0
        %619 = vmatpush1.msra.mxu0 0.0
        %620 = vmatprep.subr.mxu0 0.0
        %621 = vmatpush1.msra.mxu0 0.0
        %622 = vmatprep.subr.mxu0 0.0
        %623 = vmatpush1.msra.mxu0 0.0
        %624 = vmatprep.subr.mxu0 0.0
        %625 = vmatpush1.msra.mxu0 0.0
        %626 = vmatprep.subr.mxu0 0.0
        %627 = vmatpush1.msra.mxu0 0.0
        %628 = vmatprep.subr.mxu0 0.0
        %629 = vmatpush1.msra.mxu0 0.0
        %630 = vmatprep.subr.mxu0 0.0
        %631 = vmatpush1.msra.mxu0 0.0
        %632 = vmatprep.subr.mxu0 0.0
        %633 = vmatpush1.msra.mxu0 0.0
        %634 = vmatprep.subr.mxu0 0.0
        %635 = vmatpush1.msra.mxu0 0.0
        %636 = vmatprep.subr.mxu0 0.0
        %637 = vmatpush1.msra.mxu0 0.0
        %638 = vmatprep.subr.mxu0 0.0
        %639 = vmatpush1.msra.mxu0 0.0
        %640 = vmatprep.subr.mxu0 0.0
        %641 = vmatpush1.msra.mxu0 0.0
        %642 = vmatprep.subr.mxu0 0.0
        %643 = vmatpush1.msra.mxu0 0.0
        %644 = vmatprep.subr.mxu0 0.0
        %645 = vmatpush1.msra.mxu0 0.0
        %646 = vmatprep.subr.mxu0 0.0
        %647 = vmatpush1.msra.mxu0 0.0
        %648 = vmatprep.subr.mxu0 0.0
        %649 = vmatpush1.msra.mxu0 0.0
        %650 = vmatprep.subr.mxu0 0.0
        %651 = vmatpush1.msra.mxu0 0.0
        %652 = vmatprep.subr.mxu0 0.0
        %653 = vmatpush1.msra.mxu0 0.0
        %654 = vmatprep.subr.mxu0 0.0
        %655 = vmatpush1.msra.mxu0 0.0
        %656 = vmatprep.subr.mxu0 0.0
        %657 = vmatpush1.msra.mxu0 0.0
        %658 = vmatprep.subr.mxu0 0.0
        %659 = vmatpush1.msra.mxu0 0.0
        %660 = vmatprep.subr.mxu0 0.0
        %661 = vmatpush1.msra.mxu0 0.0
        %662 = vmatprep.subr.mxu0 0.0
        %663 = vmatpush1.msra.mxu0 0.0
        %664 = vmatprep.subr.mxu0 0.0
        %665 = vmatpush1.msra.mxu0 0.0
        %666 = vmatprep.subr.mxu0 0.0
        %667 = vmatpush1.msra.mxu0 0.0
        %668 = vmatprep.subr.mxu0 0.0
        %669 = vmatpush1.msra.mxu0 0.0
        %670 = vmatprep.subr.mxu0 0.0
        %671 = vmatpush1.msra.mxu0 0.0
        %672 = vmatprep.subr.mxu0 0.0
        %673 = vmatpush1.msra.mxu0 0.0
        %674 = vmatprep.subr.mxu0 0.0
        %675 = vmatpush1.msra.mxu0 0.0
        %676 = vmatprep.subr.mxu0 0.0
        %677 = vmatpush1.msra.mxu0 0.0
        %678 = vmatprep.mubr.f32.mxu0 0.0
        %v679 = vand.u32 %v297, 4294901760
        %v680 = vsub.f32 %v297, %v679
        %v681 = vand.u32 %v680, 4294901760
        %682 = vmatmul.mubr.f32.gmra.mrb[0].mxu0 %v681
        %v683 = vpop.f32.mrb[0].mxu0
        %v684 = vadd.f32 %v590, %v683
        %v685 = vpop.f32.mrb[0].mxu0
        %v686 = vadd.f32 %v592, %v685
        %687 = vmatprep.mubr.f32.mxu0 0.0
        %v688 = vand.u32 %v300, 4294901760
        %v689 = vsub.f32 %v300, %v688
        %v690 = vand.u32 %v689, 4294901760
        %691 = vmatmul.mubr.f32.gmra.mrb[0].mxu0 %v690
        %v692 = vpop.f32.mrb[0].mxu0
        %v693 = vadd.f32 %v598, %v692
        %v694 = vpop.f32.mrb[0].mxu0
        %v695 = vadd.f32 %v600, %v694
        %696 = vmatprep.mubr.f32.mxu0 0.0
        %v697 = vand.u32 %v303, 4294901760
        %v698 = vsub.f32 %v303, %v697
        %v699 = vand.u32 %v698, 4294901760
        %700 = vmatmul.mubr.f32.gmra.mrb[0].mxu0 %v699
        %v701 = vpop.f32.mrb[0].mxu0
        %v702 = vadd.f32 %v606, %v701
        %v703 = vpop.f32.mrb[0].mxu0
        %v704 = vadd.f32 %v608, %v703
        %705 = vdwg.mxu0
        %v706 = vand.u32 %v288, 4294901760
        %v707 = vsub.f32 %v288, %v706
        %v708 = vand.u32 %v707, 4294901760
        %709 = vmatprep.subr.mxu0 %v708
        %v710 = vand.u32 %v287, 4294901760
        %v711 = vsub.f32 %v287, %v710
        %v712 = vand.u32 %v711, 4294901760
        %713 = vmatpush1.msra.mxu0 %v712
        %v714 = vand.u32 %v292, 4294901760
        %v715 = vsub.f32 %v292, %v714
        %v716 = vand.u32 %v715, 4294901760
        %717 = vmatprep.subr.mxu0 %v716
        %v718 = vand.u32 %v291, 4294901760
        %v719 = vsub.f32 %v291, %v718
        %v720 = vand.u32 %v719, 4294901760
        %721 = vmatpush1.msra.mxu0 %v720
        %722 = vmatprep.subr.mxu0 0.0
        %723 = vmatpush1.msra.mxu0 0.0
        %724 = vmatprep.subr.mxu0 0.0
        %725 = vmatpush1.msra.mxu0 0.0
        %726 = vmatprep.subr.mxu0 0.0
        %727 = vmatpush1.msra.mxu0 0.0
        %728 = vmatprep.subr.mxu0 0.0
        %729 = vmatpush1.msra.mxu0 0.0
        %730 = vmatprep.subr.mxu0 0.0
        %731 = vmatpush1.msra.mxu0 0.0
        %732 = vmatprep.subr.mxu0 0.0
        %733 = vmatpush1.msra.mxu0 0.0
        %734 = vmatprep.subr.mxu0 0.0
        %735 = vmatpush1.msra.mxu0 0.0
        %736 = vmatprep.subr.mxu0 0.0
        %737 = vmatpush1.msra.mxu0 0.0
        %738 = vmatprep.subr.mxu0 0.0
        %739 = vmatpush1.msra.mxu0 0.0
        %740 = vmatprep.subr.mxu0 0.0
        %741 = vmatpush1.msra.mxu0 0.0
        %742 = vmatprep.subr.mxu0 0.0
        %743 = vmatpush1.msra.mxu0 0.0
        %744 = vmatprep.subr.mxu0 0.0
        %745 = vmatpush1.msra.mxu0 0.0
        %746 = vmatprep.subr.mxu0 0.0
        %747 = vmatpush1.msra.mxu0 0.0
        %748 = vmatprep.subr.mxu0 0.0
        %749 = vmatpush1.msra.mxu0 0.0
        %750 = vmatprep.subr.mxu0 0.0
        %751 = vmatpush1.msra.mxu0 0.0
        %752 = vmatprep.subr.mxu0 0.0
        %753 = vmatpush1.msra.mxu0 0.0
        %754 = vmatprep.subr.mxu0 0.0
        %755 = vmatpush1.msra.mxu0 0.0
        %756 = vmatprep.subr.mxu0 0.0
        %757 = vmatpush1.msra.mxu0 0.0
        %758 = vmatprep.subr.mxu0 0.0
        %759 = vmatpush1.msra.mxu0 0.0
        %760 = vmatprep.subr.mxu0 0.0
        %761 = vmatpush1.msra.mxu0 0.0
        %762 = vmatprep.subr.mxu0 0.0
        %763 = vmatpush1.msra.mxu0 0.0
        %764 = vmatprep.subr.mxu0 0.0
        %765 = vmatpush1.msra.mxu0 0.0
        %766 = vmatprep.subr.mxu0 0.0
        %767 = vmatpush1.msra.mxu0 0.0
        %768 = vmatprep.subr.mxu0 0.0
        %769 = vmatpush1.msra.mxu0 0.0
        %770 = vmatprep.subr.mxu0 0.0
        %771 = vmatpush1.msra.mxu0 0.0
        %772 = vmatprep.subr.mxu0 0.0
        %773 = vmatpush1.msra.mxu0 0.0
        %774 = vmatprep.subr.mxu0 0.0
        %775 = vmatpush1.msra.mxu0 0.0
        %776 = vmatprep.subr.mxu0 0.0
        %777 = vmatpush1.msra.mxu0 0.0
        %778 = vmatprep.subr.mxu0 0.0
        %779 = vmatpush1.msra.mxu0 0.0
        %780 = vmatprep.subr.mxu0 0.0
        %781 = vmatpush1.msra.mxu0 0.0
        %782 = vmatprep.mubr.f32.mxu0 0.0
        %v783 = vand.u32 %v297, 4294901760
        %784 = vmatmul.mubr.f32.gmra.mrb[0].mxu0 %v783
        %v785 = vpop.f32.mrb[0].mxu0
        %v786 = vadd.f32 %v684, %v785
        %v787 = vpop.f32.mrb[0].mxu0
        %v788 = vadd.f32 %v686, %v787
        %789 = vmatprep.mubr.f32.mxu0 0.0
        %v790 = vand.u32 %v300, 4294901760
        %791 = vmatmul.mubr.f32.gmra.mrb[0].mxu0 %v790
        %v792 = vpop.f32.mrb[0].mxu0
        %v793 = vadd.f32 %v693, %v792
        %v794 = vpop.f32.mrb[0].mxu0
        %v795 = vadd.f32 %v695, %v794
        %796 = vmatprep.mubr.f32.mxu0 0.0
        %v797 = vand.u32 %v303, 4294901760
        %798 = vmatmul.mubr.f32.gmra.mrb[0].mxu0 %v797
        %v799 = vpop.f32.mrb[0].mxu0
        %v800 = vadd.f32 %v702, %v799
        %v801 = vpop.f32.mrb[0].mxu0
        %v802 = vadd.f32 %v704, %v801
        %803 = vdwg.mxu0
        %v804 = vand.u32 %v288, 4294901760
        %805 = vmatprep.subr.mxu0 %v804
        %v806 = vand.u32 %v287, 4294901760
        %807 = vmatpush1.msra.mxu0 %v806
        %v808 = vand.u32 %v292, 4294901760
        %809 = vmatprep.subr.mxu0 %v808
        %v810 = vand.u32 %v291, 4294901760
        %811 = vmatpush1.msra.mxu0 %v810
        %812 = vmatprep.subr.mxu0 0.0
        %813 = vmatpush1.msra.mxu0 0.0
        %814 = vmatprep.subr.mxu0 0.0
        %815 = vmatpush1.msra.mxu0 0.0
        %816 = vmatprep.subr.mxu0 0.0
        %817 = vmatpush1.msra.mxu0 0.0
        %818 = vmatprep.subr.mxu0 0.0
        %819 = vmatpush1.msra.mxu0 0.0
        %820 = vmatprep.subr.mxu0 0.0
        %821 = vmatpush1.msra.mxu0 0.0
        %822 = vmatprep.subr.mxu0 0.0
        %823 = vmatpush1.msra.mxu0 0.0
        %824 = vmatprep.subr.mxu0 0.0
        %825 = vmatpush1.msra.mxu0 0.0
        %826 = vmatprep.subr.mxu0 0.0
        %827 = vmatpush1.msra.mxu0 0.0
        %828 = vmatprep.subr.mxu0 0.0
        %829 = vmatpush1.msra.mxu0 0.0
        %830 = vmatprep.subr.mxu0 0.0
        %831 = vmatpush1.msra.mxu0 0.0
        %832 = vmatprep.subr.mxu0 0.0
        %833 = vmatpush1.msra.mxu0 0.0
        %834 = vmatprep.subr.mxu0 0.0
        %835 = vmatpush1.msra.mxu0 0.0
        %836 = vmatprep.subr.mxu0 0.0
        %837 = vmatpush1.msra.mxu0 0.0
        %838 = vmatprep.subr.mxu0 0.0
        %839 = vmatpush1.msra.mxu0 0.0
        %840 = vmatprep.subr.mxu0 0.0
        %841 = vmatpush1.msra.mxu0 0.0
        %842 = vmatprep.subr.mxu0 0.0
        %843 = vmatpush1.msra.mxu0 0.0
        %844 = vmatprep.subr.mxu0 0.0
        %845 = vmatpush1.msra.mxu0 0.0
        %846 = vmatprep.subr.mxu0 0.0
        %847 = vmatpush1.msra.mxu0 0.0
        %848 = vmatprep.subr.mxu0 0.0
        %849 = vmatpush1.msra.mxu0 0.0
        %850 = vmatprep.subr.mxu0 0.0
        %851 = vmatpush1.msra.mxu0 0.0
        %852 = vmatprep.subr.mxu0 0.0
        %853 = vmatpush1.msra.mxu0 0.0
        %854 = vmatprep.subr.mxu0 0.0
        %855 = vmatpush1.msra.mxu0 0.0
        %856 = vmatprep.subr.mxu0 0.0
        %857 = vmatpush1.msra.mxu0 0.0
        %858 = vmatprep.subr.mxu0 0.0
        %859 = vmatpush1.msra.mxu0 0.0
        %860 = vmatprep.subr.mxu0 0.0
        %861 = vmatpush1.msra.mxu0 0.0
        %862 = vmatprep.subr.mxu0 0.0
        %863 = vmatpush1.msra.mxu0 0.0
        %864 = vmatprep.subr.mxu0 0.0
        %865 = vmatpush1.msra.mxu0 0.0
        %866 = vmatprep.subr.mxu0 0.0
        %867 = vmatpush1.msra.mxu0 0.0
        %868 = vmatprep.subr.mxu0 0.0
        %869 = vmatpush1.msra.mxu0 0.0
        %870 = vmatprep.subr.mxu0 0.0
        %871 = vmatpush1.msra.mxu0 0.0
        %872 = vmatprep.mubr.f32.mxu0 0.0
        %v873 = vand.u32 %v297, 4294901760
        %874 = vmatmul.mubr.f32.gmra.mrb[0].mxu0 %v873
        %v875 = vpop.f32.mrb[0].mxu0
        %v876 = vadd.f32 %v786, %v875
        %v877 = vpop.f32.mrb[0].mxu0
        %v878 = vadd.f32 %v788, %v877
        %879 = vmatprep.mubr.f32.mxu0 0.0
        %v880 = vand.u32 %v300, 4294901760
        %881 = vmatmul.mubr.f32.gmra.mrb[0].mxu0 %v880
        %v882 = vpop.f32.mrb[0].mxu0
        %v883 = vadd.f32 %v793, %v882
        %v884 = vpop.f32.mrb[0].mxu0
        %v885 = vadd.f32 %v795, %v884
        %886 = vmatprep.mubr.f32.mxu0 0.0
        %v887 = vand.u32 %v303, 4294901760
        %888 = vmatmul.mubr.f32.gmra.mrb[0].mxu0 %v887
        %v889 = vpop.f32.mrb[0].mxu0
        %v890 = vadd.f32 %v800, %v889
        %v891 = vpop.f32.mrb[0].mxu0
        %v892 = vadd.f32 %v802, %v891
        %893 = vdwg.mxu0
        %v894 = vand.u32 %v290, 4294901760
        %895 = vmatprep.subr.mxu0 %v894
        %v896 = vand.u32 %v289, 4294901760
        %897 = vmatpush1.msra.mxu0 %v896
        %v898 = vand.u32 %v294, 4294901760
        %899 = vmatprep.subr.mxu0 %v898
        %v900 = vand.u32 %v293, 4294901760
        %901 = vmatpush1.msra.mxu0 %v900
        %902 = vmatprep.subr.mxu0 0.0
        %903 = vmatpush1.msra.mxu0 0.0
        %904 = vmatprep.subr.mxu0 0.0
        %905 = vmatpush1.msra.mxu0 0.0
        %906 = vmatprep.subr.mxu0 0.0
        %907 = vmatpush1.msra.mxu0 0.0
        %908 = vmatprep.subr.mxu0 0.0
        %909 = vmatpush1.msra.mxu0 0.0
        %910 = vmatprep.subr.mxu0 0.0
        %911 = vmatpush1.msra.mxu0 0.0
        %912 = vmatprep.subr.mxu0 0.0
        %913 = vmatpush1.msra.mxu0 0.0
        %914 = vmatprep.subr.mxu0 0.0
        %915 = vmatpush1.msra.mxu0 0.0
        %916 = vmatprep.subr.mxu0 0.0
        %917 = vmatpush1.msra.mxu0 0.0
        %918 = vmatprep.subr.mxu0 0.0
        %919 = vmatpush1.msra.mxu0 0.0
        %920 = vmatprep.subr.mxu0 0.0
        %921 = vmatpush1.msra.mxu0 0.0
        %922 = vmatprep.subr.mxu0 0.0
        %923 = vmatpush1.msra.mxu0 0.0
        %924 = vmatprep.subr.mxu0 0.0
        %925 = vmatpush1.msra.mxu0 0.0
        %926 = vmatprep.subr.mxu0 0.0
        %927 = vmatpush1.msra.mxu0 0.0
        %928 = vmatprep.subr.mxu0 0.0
        %929 = vmatpush1.msra.mxu0 0.0
        %930 = vmatprep.subr.mxu0 0.0
        %931 = vmatpush1.msra.mxu0 0.0
        %932 = vmatprep.subr.mxu0 0.0
        %933 = vmatpush1.msra.mxu0 0.0
        %934 = vmatprep.subr.mxu0 0.0
        %935 = vmatpush1.msra.mxu0 0.0
        %936 = vmatprep.subr.mxu0 0.0
        %937 = vmatpush1.msra.mxu0 0.0
        %938 = vmatprep.subr.mxu0 0.0
        %939 = vmatpush1.msra.mxu0 0.0
        %940 = vmatprep.subr.mxu0 0.0
        %941 = vmatpush1.msra.mxu0 0.0
        %942 = vmatprep.subr.mxu0 0.0
        %943 = vmatpush1.msra.mxu0 0.0
        %944 = vmatprep.subr.mxu0 0.0
        %945 = vmatpush1.msra.mxu0 0.0
        %946 = vmatprep.subr.mxu0 0.0
        %947 = vmatpush1.msra.mxu0 0.0
        %948 = vmatprep.subr.mxu0 0.0
        %949 = vmatpush1.msra.mxu0 0.0
        %950 = vmatprep.subr.mxu0 0.0
        %951 = vmatpush1.msra.mxu0 0.0
        %952 = vmatprep.subr.mxu0 0.0
        %953 = vmatpush1.msra.mxu0 0.0
        %954 = vmatprep.subr.mxu0 0.0
        %955 = vmatpush1.msra.mxu0 0.0
        %956 = vmatprep.subr.mxu0 0.0
        %957 = vmatpush1.msra.mxu0 0.0
        %958 = vmatprep.subr.mxu0 0.0
        %959 = vmatpush1.msra.mxu0 0.0
        %960 = vmatprep.subr.mxu0 0.0
        %961 = vmatpush1.msra.mxu0 0.0
        %962 = vmatprep.mubr.f32.mxu0 0.0
        %v963 = vand.u32 %v297, 4294901760
        %v964 = vsub.f32 %v297, %v963
        %v965 = vand.u32 %v964, 4294901760
        %v966 = vsub.f32 %v964, %v965
        %v967 = vand.u32 %v966, 4294901760
        %968 = vmatmul.mubr.f32.gmra.mrb[0].mxu0 %v967
        %v969 = vpop.f32.mrb[0].mxu0
        %v970 = vadd.f32 0.0, %v969
        %v971 = vpop.f32.mrb[0].mxu0
        %v972 = vadd.f32 0.0, %v971
        %973 = vmatprep.mubr.f32.mxu0 0.0
        %v974 = vand.u32 %v300, 4294901760
        %v975 = vsub.f32 %v300, %v974
        %v976 = vand.u32 %v975, 4294901760
        %v977 = vsub.f32 %v975, %v976
        %v978 = vand.u32 %v977, 4294901760
        %979 = vmatmul.mubr.f32.gmra.mrb[0].mxu0 %v978
        %v980 = vpop.f32.mrb[0].mxu0
        %v981 = vadd.f32 0.0, %v980
        %v982 = vpop.f32.mrb[0].mxu0
        %v983 = vadd.f32 0.0, %v982
        %984 = vmatprep.mubr.f32.mxu0 0.0
        %v985 = vand.u32 %v303, 4294901760
        %v986 = vsub.f32 %v303, %v985
        %v987 = vand.u32 %v986, 4294901760
        %v988 = vsub.f32 %v986, %v987
        %v989 = vand.u32 %v988, 4294901760
        %990 = vmatmul.mubr.f32.gmra.mrb[0].mxu0 %v989
        %v991 = vpop.f32.mrb[0].mxu0
        %v992 = vadd.f32 0.0, %v991
        %v993 = vpop.f32.mrb[0].mxu0
        %v994 = vadd.f32 0.0, %v993
        %995 = vdwg.mxu0
        %v996 = vand.u32 %v290, 4294901760
        %v997 = vsub.f32 %v290, %v996
        %v998 = vand.u32 %v997, 4294901760
        %v999 = vsub.f32 %v997, %v998
        %v1000 = vand.u32 %v999, 4294901760
        %1001 = vmatprep.subr.mxu0 %v1000
        %v1002 = vand.u32 %v289, 4294901760
        %v1003 = vsub.f32 %v289, %v1002
        %v1004 = vand.u32 %v1003, 4294901760
        %v1005 = vsub.f32 %v1003, %v1004
        %v1006 = vand.u32 %v1005, 4294901760
        %1007 = vmatpush1.msra.mxu0 %v1006
        %v1008 = vand.u32 %v294, 4294901760
        %v1009 = vsub.f32 %v294, %v1008
        %v1010 = vand.u32 %v1009, 4294901760
        %v1011 = vsub.f32 %v1009, %v1010
        %v1012 = vand.u32 %v1011, 4294901760
        %1013 = vmatprep.subr.mxu0 %v1012
        %v1014 = vand.u32 %v293, 4294901760
        %v1015 = vsub.f32 %v293, %v1014
        %v1016 = vand.u32 %v1015, 4294901760
        %v1017 = vsub.f32 %v1015, %v1016
        %v1018 = vand.u32 %v1017, 4294901760
        %1019 = vmatpush1.msra.mxu0 %v1018
        %1020 = vmatprep.subr.mxu0 0.0
        %1021 = vmatpush1.msra.mxu0 0.0
        %1022 = vmatprep.subr.mxu0 0.0
        %1023 = vmatpush1.msra.mxu0 0.0
        %1024 = vmatprep.subr.mxu0 0.0
        %1025 = vmatpush1.msra.mxu0 0.0
        %1026 = vmatprep.subr.mxu0 0.0
        %1027 = vmatpush1.msra.mxu0 0.0
        %1028 = vmatprep.subr.mxu0 0.0
        %1029 = vmatpush1.msra.mxu0 0.0
        %1030 = vmatprep.subr.mxu0 0.0
        %1031 = vmatpush1.msra.mxu0 0.0
        %1032 = vmatprep.subr.mxu0 0.0
        %1033 = vmatpush1.msra.mxu0 0.0
        %1034 = vmatprep.subr.mxu0 0.0
        %1035 = vmatpush1.msra.mxu0 0.0
        %1036 = vmatprep.subr.mxu0 0.0
        %1037 = vmatpush1.msra.mxu0 0.0
        %1038 = vmatprep.subr.mxu0 0.0
        %1039 = vmatpush1.msra.mxu0 0.0
        %1040 = vmatprep.subr.mxu0 0.0
        %1041 = vmatpush1.msra.mxu0 0.0
        %1042 = vmatprep.subr.mxu0 0.0
        %1043 = vmatpush1.msra.mxu0 0.0
        %1044 = vmatprep.subr.mxu0 0.0
        %1045 = vmatpush1.msra.mxu0 0.0
        %1046 = vmatprep.subr.mxu0 0.0
        %1047 = vmatpush1.msra.mxu0 0.0
        %1048 = vmatprep.subr.mxu0 0.0
        %1049 = vmatpush1.msra.mxu0 0.0
        %1050 = vmatprep.subr.mxu0 0.0
        %1051 = vmatpush1.msra.mxu0 0.0
        %1052 = vmatprep.subr.mxu0 0.0
        %1053 = vmatpush1.msra.mxu0 0.0
        %1054 = vmatprep.subr.mxu0 0.0
        %1055 = vmatpush1.msra.mxu0 0.0
        %1056 = vmatprep.subr.mxu0 0.0
        %1057 = vmatpush1.msra.mxu0 0.0
        %1058 = vmatprep.subr.mxu0 0.0
        %1059 = vmatpush1.msra.mxu0 0.0
        %1060 = vmatprep.subr.mxu0 0.0
        %1061 = vmatpush1.msra.mxu0 0.0
        %1062 = vmatprep.subr.mxu0 0.0
        %1063 = vmatpush1.msra.mxu0 0.0
        %1064 = vmatprep.subr.mxu0 0.0
        %1065 = vmatpush1.msra.mxu0 0.0
        %1066 = vmatprep.subr.mxu0 0.0
        %1067 = vmatpush1.msra.mxu0 0.0
        %1068 = vmatprep.subr.mxu0 0.0
        %1069 = vmatpush1.msra.mxu0 0.0
        %1070 = vmatprep.subr.mxu0 0.0
        %1071 = vmatpush1.msra.mxu0 0.0
        %1072 = vmatprep.subr.mxu0 0.0
        %1073 = vmatpush1.msra.mxu0 0.0
        %1074 = vmatprep.subr.mxu0 0.0
        %1075 = vmatpush1.msra.mxu0 0.0
        %1076 = vmatprep.subr.mxu0 0.0
        %1077 = vmatpush1.msra.mxu0 0.0
        %1078 = vmatprep.subr.mxu0 0.0
        %1079 = vmatpush1.msra.mxu0 0.0
        %1080 = vmatprep.mubr.f32.mxu0 0.0
        %v1081 = vand.u32 %v297, 4294901760
        %1082 = vmatmul.mubr.f32.gmra.mrb[0].mxu0 %v1081
        %v1083 = vpop.f32.mrb[0].mxu0
        %v1084 = vadd.f32 %v970, %v1083
        %v1085 = vpop.f32.mrb[0].mxu0
        %v1086 = vadd.f32 %v972, %v1085
        %1087 = vmatprep.mubr.f32.mxu0 0.0
        %v1088 = vand.u32 %v300, 4294901760
        %1089 = vmatmul.mubr.f32.gmra.mrb[0].mxu0 %v1088
        %v1090 = vpop.f32.mrb[0].mxu0
        %v1091 = vadd.f32 %v981, %v1090
        %v1092 = vpop.f32.mrb[0].mxu0
        %v1093 = vadd.f32 %v983, %v1092
        %1094 = vmatprep.mubr.f32.mxu0 0.0
        %v1095 = vand.u32 %v303, 4294901760
        %1096 = vmatmul.mubr.f32.gmra.mrb[0].mxu0 %v1095
        %v1097 = vpop.f32.mrb[0].mxu0
        %v1098 = vadd.f32 %v992, %v1097
        %v1099 = vpop.f32.mrb[0].mxu0
        %v1100 = vadd.f32 %v994, %v1099
        %1101 = vdwg.mxu0
        %v1102 = vand.u32 %v290, 4294901760
        %v1103 = vsub.f32 %v290, %v1102
        %1104 = vmatprep.subr.mxu0 %v1103
        %v1105 = vand.u32 %v289, 4294901760
        %v1106 = vsub.f32 %v289, %v1105
        %1107 = vmatpush1.msra.mxu0 %v1106
        %v1108 = vand.u32 %v294, 4294901760
        %v1109 = vsub.f32 %v294, %v1108
        %1110 = vmatprep.subr.mxu0 %v1109
        %v1111 = vand.u32 %v293, 4294901760
        %v1112 = vsub.f32 %v293, %v1111
        %1113 = vmatpush1.msra.mxu0 %v1112
        %1114 = vmatprep.subr.mxu0 0.0
        %1115 = vmatpush1.msra.mxu0 0.0
        %1116 = vmatprep.subr.mxu0 0.0
        %1117 = vmatpush1.msra.mxu0 0.0
        %1118 = vmatprep.subr.mxu0 0.0
        %1119 = vmatpush1.msra.mxu0 0.0
        %1120 = vmatprep.subr.mxu0 0.0
        %1121 = vmatpush1.msra.mxu0 0.0
        %1122 = vmatprep.subr.mxu0 0.0
        %1123 = vmatpush1.msra.mxu0 0.0
        %1124 = vmatprep.subr.mxu0 0.0
        %1125 = vmatpush1.msra.mxu0 0.0
        %1126 = vmatprep.subr.mxu0 0.0
        %1127 = vmatpush1.msra.mxu0 0.0
        %1128 = vmatprep.subr.mxu0 0.0
        %1129 = vmatpush1.msra.mxu0 0.0
        %1130 = vmatprep.subr.mxu0 0.0
        %1131 = vmatpush1.msra.mxu0 0.0
        %1132 = vmatprep.subr.mxu0 0.0
        %1133 = vmatpush1.msra.mxu0 0.0
        %1134 = vmatprep.subr.mxu0 0.0
        %1135 = vmatpush1.msra.mxu0 0.0
        %1136 = vmatprep.subr.mxu0 0.0
        %1137 = vmatpush1.msra.mxu0 0.0
        %1138 = vmatprep.subr.mxu0 0.0
        %1139 = vmatpush1.msra.mxu0 0.0
        %1140 = vmatprep.subr.mxu0 0.0
        %1141 = vmatpush1.msra.mxu0 0.0
        %1142 = vmatprep.subr.mxu0 0.0
        %1143 = vmatpush1.msra.mxu0 0.0
        %1144 = vmatprep.subr.mxu0 0.0
        %1145 = vmatpush1.msra.mxu0 0.0
        %1146 = vmatprep.subr.mxu0 0.0
        %1147 = vmatpush1.msra.mxu0 0.0
        %1148 = vmatprep.subr.mxu0 0.0
        %1149 = vmatpush1.msra.mxu0 0.0
        %1150 = vmatprep.subr.mxu0 0.0
        %1151 = vmatpush1.msra.mxu0 0.0
        %1152 = vmatprep.subr.mxu0 0.0
        %1153 = vmatpush1.msra.mxu0 0.0
        %1154 = vmatprep.subr.mxu0 0.0
        %1155 = vmatpush1.msra.mxu0 0.0
        %1156 = vmatprep.subr.mxu0 0.0
        %1157 = vmatpush1.msra.mxu0 0.0
        %1158 = vmatprep.subr.mxu0 0.0
        %1159 = vmatpush1.msra.mxu0 0.0
        %1160 = vmatprep.subr.mxu0 0.0
        %1161 = vmatpush1.msra.mxu0 0.0
        %1162 = vmatprep.subr.mxu0 0.0
        %1163 = vmatpush1.msra.mxu0 0.0
        %1164 = vmatprep.subr.mxu0 0.0
        %1165 = vmatpush1.msra.mxu0 0.0
        %1166 = vmatprep.subr.mxu0 0.0
        %1167 = vmatpush1.msra.mxu0 0.0
        %1168 = vmatprep.subr.mxu0 0.0
        %1169 = vmatpush1.msra.mxu0 0.0
        %1170 = vmatprep.subr.mxu0 0.0
        %1171 = vmatpush1.msra.mxu0 0.0
        %1172 = vmatprep.subr.mxu0 0.0
        %1173 = vmatpush1.msra.mxu0 0.0
        %1174 = vmatprep.mubr.f32.mxu0 0.0
        %v1175 = vand.u32 %v297, 4294901760
        %v1176 = vsub.f32 %v297, %v1175
        %1177 = vmatmul.mubr.f32.gmra.mrb[0].mxu0 %v1176
        %v1178 = vpop.f32.mrb[0].mxu0
        %v1179 = vadd.f32 %v1084, %v1178
        %v1180 = vpop.f32.mrb[0].mxu0
        %v1181 = vadd.f32 %v1086, %v1180
        %1182 = vmatprep.mubr.f32.mxu0 0.0
        %v1183 = vand.u32 %v300, 4294901760
        %v1184 = vsub.f32 %v300, %v1183
        %1185 = vmatmul.mubr.f32.gmra.mrb[0].mxu0 %v1184
        %v1186 = vpop.f32.mrb[0].mxu0
        %v1187 = vadd.f32 %v1091, %v1186
        %v1188 = vpop.f32.mrb[0].mxu0
        %v1189 = vadd.f32 %v1093, %v1188
        %1190 = vmatprep.mubr.f32.mxu0 0.0
        %v1191 = vand.u32 %v303, 4294901760
        %v1192 = vsub.f32 %v303, %v1191
        %1193 = vmatmul.mubr.f32.gmra.mrb[0].mxu0 %v1192
        %v1194 = vpop.f32.mrb[0].mxu0
        %v1195 = vadd.f32 %v1098, %v1194
        %v1196 = vpop.f32.mrb[0].mxu0
        %v1197 = vadd.f32 %v1100, %v1196
        %1198 = vdwg.mxu0
        %v1199 = vand.u32 %v290, 4294901760
        %1200 = vmatprep.subr.mxu0 %v1199
        %v1201 = vand.u32 %v289, 4294901760
        %1202 = vmatpush1.msra.mxu0 %v1201
        %v1203 = vand.u32 %v294, 4294901760
        %1204 = vmatprep.subr.mxu0 %v1203
        %v1205 = vand.u32 %v293, 4294901760
        %1206 = vmatpush1.msra.mxu0 %v1205
        %1207 = vmatprep.subr.mxu0 0.0
        %1208 = vmatpush1.msra.mxu0 0.0
        %1209 = vmatprep.subr.mxu0 0.0
        %1210 = vmatpush1.msra.mxu0 0.0
        %1211 = vmatprep.subr.mxu0 0.0
        %1212 = vmatpush1.msra.mxu0 0.0
        %1213 = vmatprep.subr.mxu0 0.0
        %1214 = vmatpush1.msra.mxu0 0.0
        %1215 = vmatprep.subr.mxu0 0.0
        %1216 = vmatpush1.msra.mxu0 0.0
        %1217 = vmatprep.subr.mxu0 0.0
        %1218 = vmatpush1.msra.mxu0 0.0
        %1219 = vmatprep.subr.mxu0 0.0
        %1220 = vmatpush1.msra.mxu0 0.0
        %1221 = vmatprep.subr.mxu0 0.0
        %1222 = vmatpush1.msra.mxu0 0.0
        %1223 = vmatprep.subr.mxu0 0.0
        %1224 = vmatpush1.msra.mxu0 0.0
        %1225 = vmatprep.subr.mxu0 0.0
        %1226 = vmatpush1.msra.mxu0 0.0
        %1227 = vmatprep.subr.mxu0 0.0
        %1228 = vmatpush1.msra.mxu0 0.0
        %1229 = vmatprep.subr.mxu0 0.0
        %1230 = vmatpush1.msra.mxu0 0.0
        %1231 = vmatprep.subr.mxu0 0.0
        %1232 = vmatpush1.msra.mxu0 0.0
        %1233 = vmatprep.subr.mxu0 0.0
        %1234 = vmatpush1.msra.mxu0 0.0
        %1235 = vmatprep.subr.mxu0 0.0
        %1236 = vmatpush1.msra.mxu0 0.0
        %1237 = vmatprep.subr.mxu0 0.0
        %1238 = vmatpush1.msra.mxu0 0.0
        %1239 = vmatprep.subr.mxu0 0.0
        %1240 = vmatpush1.msra.mxu0 0.0
        %1241 = vmatprep.subr.mxu0 0.0
        %1242 = vmatpush1.msra.mxu0 0.0
        %1243 = vmatprep.subr.mxu0 0.0
        %1244 = vmatpush1.msra.mxu0 0.0
        %1245 = vmatprep.subr.mxu0 0.0
        %1246 = vmatpush1.msra.mxu0 0.0
        %1247 = vmatprep.subr.mxu0 0.0
        %1248 = vmatpush1.msra.mxu0 0.0
        %1249 = vmatprep.subr.mxu0 0.0
        %1250 = vmatpush1.msra.mxu0 0.0
        %1251 = vmatprep.subr.mxu0 0.0
        %1252 = vmatpush1.msra.mxu0 0.0
        %1253 = vmatprep.subr.mxu0 0.0
        %1254 = vmatpush1.msra.mxu0 0.0
        %1255 = vmatprep.subr.mxu0 0.0
        %1256 = vmatpush1.msra.mxu0 0.0
        %1257 = vmatprep.subr.mxu0 0.0
        %1258 = vmatpush1.msra.mxu0 0.0
        %1259 = vmatprep.subr.mxu0 0.0
        %1260 = vmatpush1.msra.mxu0 0.0
        %1261 = vmatprep.subr.mxu0 0.0
        %1262 = vmatpush1.msra.mxu0 0.0
        %1263 = vmatprep.subr.mxu0 0.0
        %1264 = vmatpush1.msra.mxu0 0.0
        %1265 = vmatprep.subr.mxu0 0.0
        %1266 = vmatpush1.msra.mxu0 0.0
        %1267 = vmatprep.mubr.f32.mxu0 0.0
        %v1268 = vand.u32 %v297, 4294901760
        %v1269 = vsub.f32 %v297, %v1268
        %v1270 = vand.u32 %v1269, 4294901760
        %1271 = vmatmul.mubr.f32.gmra.mrb[0].mxu0 %v1270
        %v1272 = vpop.f32.mrb[0].mxu0
        %v1273 = vadd.f32 %v1179, %v1272
        %v1274 = vpop.f32.mrb[0].mxu0
        %v1275 = vadd.f32 %v1181, %v1274
        %1276 = vmatprep.mubr.f32.mxu0 0.0
        %v1277 = vand.u32 %v300, 4294901760
        %v1278 = vsub.f32 %v300, %v1277
        %v1279 = vand.u32 %v1278, 4294901760
        %1280 = vmatmul.mubr.f32.gmra.mrb[0].mxu0 %v1279
        %v1281 = vpop.f32.mrb[0].mxu0
        %v1282 = vadd.f32 %v1187, %v1281
        %v1283 = vpop.f32.mrb[0].mxu0
        %v1284 = vadd.f32 %v1189, %v1283
        %1285 = vmatprep.mubr.f32.mxu0 0.0
        %v1286 = vand.u32 %v303, 4294901760
        %v1287 = vsub.f32 %v303, %v1286
        %v1288 = vand.u32 %v1287, 4294901760
        %1289 = vmatmul.mubr.f32.gmra.mrb[0].mxu0 %v1288
        %v1290 = vpop.f32.mrb[0].mxu0
        %v1291 = vadd.f32 %v1195, %v1290
        %v1292 = vpop.f32.mrb[0].mxu0
        %v1293 = vadd.f32 %v1197, %v1292
        %1294 = vdwg.mxu0
        %v1295 = vand.u32 %v290, 4294901760
        %v1296 = vsub.f32 %v290, %v1295
        %v1297 = vand.u32 %v1296, 4294901760
        %1298 = vmatprep.subr.mxu0 %v1297
        %v1299 = vand.u32 %v289, 4294901760
        %v1300 = vsub.f32 %v289, %v1299
        %v1301 = vand.u32 %v1300, 4294901760
        %1302 = vmatpush1.msra.mxu0 %v1301
        %v1303 = vand.u32 %v294, 4294901760
        %v1304 = vsub.f32 %v294, %v1303
        %v1305 = vand.u32 %v1304, 4294901760
        %1306 = vmatprep.subr.mxu0 %v1305
        %v1307 = vand.u32 %v293, 4294901760
        %v1308 = vsub.f32 %v293, %v1307
        %v1309 = vand.u32 %v1308, 4294901760
        %1310 = vmatpush1.msra.mxu0 %v1309
        %1311 = vmatprep.subr.mxu0 0.0
        %1312 = vmatpush1.msra.mxu0 0.0
        %1313 = vmatprep.subr.mxu0 0.0
        %1314 = vmatpush1.msra.mxu0 0.0
        %1315 = vmatprep.subr.mxu0 0.0
        %1316 = vmatpush1.msra.mxu0 0.0
        %1317 = vmatprep.subr.mxu0 0.0
        %1318 = vmatpush1.msra.mxu0 0.0
        %1319 = vmatprep.subr.mxu0 0.0
        %1320 = vmatpush1.msra.mxu0 0.0
        %1321 = vmatprep.subr.mxu0 0.0
        %1322 = vmatpush1.msra.mxu0 0.0
        %1323 = vmatprep.subr.mxu0 0.0
        %1324 = vmatpush1.msra.mxu0 0.0
        %1325 = vmatprep.subr.mxu0 0.0
        %1326 = vmatpush1.msra.mxu0 0.0
        %1327 = vmatprep.subr.mxu0 0.0
        %1328 = vmatpush1.msra.mxu0 0.0
        %1329 = vmatprep.subr.mxu0 0.0
        %1330 = vmatpush1.msra.mxu0 0.0
        %1331 = vmatprep.subr.mxu0 0.0
        %1332 = vmatpush1.msra.mxu0 0.0
        %1333 = vmatprep.subr.mxu0 0.0
        %1334 = vmatpush1.msra.mxu0 0.0
        %1335 = vmatprep.subr.mxu0 0.0
        %1336 = vmatpush1.msra.mxu0 0.0
        %1337 = vmatprep.subr.mxu0 0.0
        %1338 = vmatpush1.msra.mxu0 0.0
        %1339 = vmatprep.subr.mxu0 0.0
        %1340 = vmatpush1.msra.mxu0 0.0
        %1341 = vmatprep.subr.mxu0 0.0
        %1342 = vmatpush1.msra.mxu0 0.0
        %1343 = vmatprep.subr.mxu0 0.0
        %1344 = vmatpush1.msra.mxu0 0.0
        %1345 = vmatprep.subr.mxu0 0.0
        %1346 = vmatpush1.msra.mxu0 0.0
        %1347 = vmatprep.subr.mxu0 0.0
        %1348 = vmatpush1.msra.mxu0 0.0
        %1349 = vmatprep.subr.mxu0 0.0
        %1350 = vmatpush1.msra.mxu0 0.0
        %1351 = vmatprep.subr.mxu0 0.0
        %1352 = vmatpush1.msra.mxu0 0.0
        %1353 = vmatprep.subr.mxu0 0.0
        %1354 = vmatpush1.msra.mxu0 0.0
        %1355 = vmatprep.subr.mxu0 0.0
        %1356 = vmatpush1.msra.mxu0 0.0
        %1357 = vmatprep.subr.mxu0 0.0
        %1358 = vmatpush1.msra.mxu0 0.0
        %1359 = vmatprep.subr.mxu0 0.0
        %1360 = vmatpush1.msra.mxu0 0.0
        %1361 = vmatprep.subr.mxu0 0.0
        %1362 = vmatpush1.msra.mxu0 0.0
        %1363 = vmatprep.subr.mxu0 0.0
        %1364 = vmatpush1.msra.mxu0 0.0
        %1365 = vmatprep.subr.mxu0 0.0
        %1366 = vmatpush1.msra.mxu0 0.0
        %1367 = vmatprep.subr.mxu0 0.0
        %1368 = vmatpush1.msra.mxu0 0.0
        %1369 = vmatprep.subr.mxu0 0.0
        %1370 = vmatpush1.msra.mxu0 0.0
        %1371 = vmatprep.mubr.f32.mxu0 0.0
        %v1372 = vand.u32 %v297, 4294901760
        %1373 = vmatmul.mubr.f32.gmra.mrb[0].mxu0 %v1372
        %v1374 = vpop.f32.mrb[0].mxu0
        %v1375 = vadd.f32 %v1273, %v1374
        %v1376 = vpop.f32.mrb[0].mxu0
        %v1377 = vadd.f32 %v1275, %v1376
        %1378 = vmatprep.mubr.f32.mxu0 0.0
        %v1379 = vand.u32 %v300, 4294901760
        %1380 = vmatmul.mubr.f32.gmra.mrb[0].mxu0 %v1379
        %v1381 = vpop.f32.mrb[0].mxu0
        %v1382 = vadd.f32 %v1282, %v1381
        %v1383 = vpop.f32.mrb[0].mxu0
        %v1384 = vadd.f32 %v1284, %v1383
        %1385 = vmatprep.mubr.f32.mxu0 0.0
        %v1386 = vand.u32 %v303, 4294901760
        %1387 = vmatmul.mubr.f32.gmra.mrb[0].mxu0 %v1386
        %v1388 = vpop.f32.mrb[0].mxu0
        %v1389 = vadd.f32 %v1291, %v1388
        %v1390 = vpop.f32.mrb[0].mxu0
        %v1391 = vadd.f32 %v1293, %v1390
        %1392 = vdwg.mxu0
        %v1393 = vand.u32 %v290, 4294901760
        %1394 = vmatprep.subr.mxu0 %v1393
        %v1395 = vand.u32 %v289, 4294901760
        %1396 = vmatpush1.msra.mxu0 %v1395
        %v1397 = vand.u32 %v294, 4294901760
        %1398 = vmatprep.subr.mxu0 %v1397
        %v1399 = vand.u32 %v293, 4294901760
        %1400 = vmatpush1.msra.mxu0 %v1399
        %1401 = vmatprep.subr.mxu0 0.0
        %1402 = vmatpush1.msra.mxu0 0.0
        %1403 = vmatprep.subr.mxu0 0.0
        %1404 = vmatpush1.msra.mxu0 0.0
        %1405 = vmatprep.subr.mxu0 0.0
        %1406 = vmatpush1.msra.mxu0 0.0
        %1407 = vmatprep.subr.mxu0 0.0
        %1408 = vmatpush1.msra.mxu0 0.0
        %1409 = vmatprep.subr.mxu0 0.0
        %1410 = vmatpush1.msra.mxu0 0.0
        %1411 = vmatprep.subr.mxu0 0.0
        %1412 = vmatpush1.msra.mxu0 0.0
        %1413 = vmatprep.subr.mxu0 0.0
        %1414 = vmatpush1.msra.mxu0 0.0
        %1415 = vmatprep.subr.mxu0 0.0
        %1416 = vmatpush1.msra.mxu0 0.0
        %1417 = vmatprep.subr.mxu0 0.0
        %1418 = vmatpush1.msra.mxu0 0.0
        %1419 = vmatprep.subr.mxu0 0.0
        %1420 = vmatpush1.msra.mxu0 0.0
        %1421 = vmatprep.subr.mxu0 0.0
        %1422 = vmatpush1.msra.mxu0 0.0
        %1423 = vmatprep.subr.mxu0 0.0
        %1424 = vmatpush1.msra.mxu0 0.0
        %1425 = vmatprep.subr.mxu0 0.0
        %1426 = vmatpush1.msra.mxu0 0.0
        %1427 = vmatprep.subr.mxu0 0.0
        %1428 = vmatpush1.msra.mxu0 0.0
        %1429 = vmatprep.subr.mxu0 0.0
        %1430 = vmatpush1.msra.mxu0 0.0
        %1431 = vmatprep.subr.mxu0 0.0
        %1432 = vmatpush1.msra.mxu0 0.0
        %1433 = vmatprep.subr.mxu0 0.0
        %1434 = vmatpush1.msra.mxu0 0.0
        %1435 = vmatprep.subr.mxu0 0.0
        %1436 = vmatpush1.msra.mxu0 0.0
        %1437 = vmatprep.subr.mxu0 0.0
        %1438 = vmatpush1.msra.mxu0 0.0
        %1439 = vmatprep.subr.mxu0 0.0
        %1440 = vmatpush1.msra.mxu0 0.0
        %1441 = vmatprep.subr.mxu0 0.0
        %1442 = vmatpush1.msra.mxu0 0.0
        %1443 = vmatprep.subr.mxu0 0.0
        %1444 = vmatpush1.msra.mxu0 0.0
        %1445 = vmatprep.subr.mxu0 0.0
        %1446 = vmatpush1.msra.mxu0 0.0
        %1447 = vmatprep.subr.mxu0 0.0
        %1448 = vmatpush1.msra.mxu0 0.0
        %1449 = vmatprep.subr.mxu0 0.0
        %1450 = vmatpush1.msra.mxu0 0.0
        %1451 = vmatprep.subr.mxu0 0.0
        %1452 = vmatpush1.msra.mxu0 0.0
        %1453 = vmatprep.subr.mxu0 0.0
        %1454 = vmatpush1.msra.mxu0 0.0
        %1455 = vmatprep.subr.mxu0 0.0
        %1456 = vmatpush1.msra.mxu0 0.0
        %1457 = vmatprep.subr.mxu0 0.0
        %1458 = vmatpush1.msra.mxu0 0.0
        %1459 = vmatprep.subr.mxu0 0.0
        %1460 = vmatpush1.msra.mxu0 0.0
        %1461 = vmatprep.mubr.f32.mxu0 0.0
        %v1462 = vand.u32 %v297, 4294901760
        %1463 = vmatmul.mubr.f32.gmra.mrb[0].mxu0 %v1462
        %v1464 = vpop.f32.mrb[0].mxu0
        %v1465 = vadd.f32 %v1375, %v1464
        %v1466 = vpop.f32.mrb[0].mxu0
        %v1467 = vadd.f32 %v1377, %v1466
        %1468 = vmatprep.mubr.f32.mxu0 0.0
        %v1469 = vand.u32 %v300, 4294901760
        %1470 = vmatmul.mubr.f32.gmra.mrb[0].mxu0 %v1469
        %v1471 = vpop.f32.mrb[0].mxu0
        %v1472 = vadd.f32 %v1382, %v1471
        %v1473 = vpop.f32.mrb[0].mxu0
        %v1474 = vadd.f32 %v1384, %v1473
        %1475 = vmatprep.mubr.f32.mxu0 0.0
        %v1476 = vand.u32 %v303, 4294901760
        %1477 = vmatmul.mubr.f32.gmra.mrb[0].mxu0 %v1476
        %v1478 = vpop.f32.mrb[0].mxu0
        %v1479 = vadd.f32 %v1389, %v1478
        %v1480 = vpop.f32.mrb[0].mxu0
        %v1481 = vadd.f32 %v1391, %v1480
        %1482 = vdwg.mxu0
        %vm1483 = vcmp.gt.f32.partialorder %v890, 0.5
        %vm1484 = vcmp.gt.f32.partialorder %v892, 0.5
        %vm1485 = vcmp.gt.f32.partialorder %v1479, 0.5
        %vm1486 = vcmp.gt.f32.partialorder %v1481, 0.5
        %v1487 = vsel %vm1483, 1.0, 0.0
        %v1488 = vsel %vm1484, 1.0, 0.0
        %v1489 = vsel %vm1485, 1.0, 0.0
        %v1490 = vsel %vm1486, 1.0, 0.0
        %v1491 = vld [vmem:[%s3] sm:$0xf]
        %v1492 = vld [vmem:[#allocation2] sm:$0xff]
        %1494 = vset.pattern.permute.xlu0 0
        %1495 = vperm.xlu0 %1494, %v1492
        %v1496 = vpop.permute.xlu0 %1495
        %v1498 = vadd.f32 %v1496, %v883
        %v1499 = vadd.f32 %v1496, %v885
        %v1500 = vadd.f32 %v1496, %v1472
        %v1501 = vadd.f32 %v1496, %v1474
        %v1503 = vlaneseq
        %v1504 = vshrl.u32 %v1503, 7
        %v1505 = vsub.s32 0, %v1504
        %v1506 = vrot.slane %v1491, %v1505
        %v1507 = vlaneseq
        %v1508 = vshrl.u32 %v1507, 7
        %v1509 = vsub.s32 1, %v1508
        %v1510 = vrot.slane %v1491, %v1509
        %v1511 = vlaneseq
        %v1512 = vshrl.u32 %v1511, 7
        %v1513 = vsub.s32 2, %v1512
        %v1514 = vrot.slane %v1491, %v1513
        %v1515 = vlaneseq
        %v1516 = vshrl.u32 %v1515, 7
        %v1517 = vsub.s32 3, %v1516
        %v1518 = vrot.slane %v1491, %v1517
        %v1523 = vmul.f32 %v1506, %v876
        %v1524 = vmul.f32 %v1510, %v878
        %v1525 = vmul.f32 %v1514, %v1465
        %v1526 = vmul.f32 %v1518, %v1467
        %v1527 = vadd.f32 %v1498, %v1523
        %v1528 = vadd.f32 %v1499, %v1524
        %v1529 = vadd.f32 %v1500, %v1525
        %v1530 = vadd.f32 %v1501, %v1526
        %v1531 = vfloor.f32 %v1527
        %v1532 = vfloor.f32 %v1528
        %v1533 = vfloor.f32 %v1529
        %v1534 = vfloor.f32 %v1530
        %v1535 = vsub.f32 %v1527, %v1531
        %v1536 = vsub.f32 %v1528, %v1532
        %v1537 = vsub.f32 %v1529, %v1533
        %v1538 = vsub.f32 %v1530, %v1534
        %v1539 = vmul.f32 %v1535, 6.2831855
        %v1540 = vmul.f32 %v1536, 6.2831855
        %v1541 = vmul.f32 %v1537, 6.2831855
        %v1542 = vmul.f32 %v1538, 6.2831855
        %v1543 = vand.u32 2147483647, %v1539
        %vm1544 = vcmp.le.f32.partialorder %v1543, 0.7853982
        %vm1545 = vcmp.lt.s32.totalorder %v1539, 0
        %v1546 = vand.u32 %v1539, 2139095040
        %v1547 = vshrl.u32 %v1546, 23
        %v1548 = vsub.s32 %v1547, 127
        %v1549 = vand.u32 2147483647, %v1539
        %v1550 = vand.u32 %v1549, 8388607
        %v1551 = vor.u32 %v1550, 8388608
        %v1552 = vsub.s32 0, %v1551
        %v1553 = vadd.s32 %v1548, 1
        %vm1554 = vcmp.gt.s32.totalorder %v1553, 0
        %v1555 = vsel %vm1554, %v1553, 0
        %v1556 = vshrl.u32 %v1555, 5
        %v1557 = vand.u32 %v1555, 31
        %v1558 = vsub.s32 32, %v1557
        %v1559 = vshrl.u32 683565275, %v1558
        %v1560 = vshll.u32 683565275, %v1557
        %v1561 = vshrl.u32 2475754826, %v1558
        %v1562 = vor.u32 %v1560, %v1561
        %v1563 = vshll.u32 2475754826, %v1557
        %v1564 = vshrl.u32 2131351028, %v1558
        %v1565 = vor.u32 %v1563, %v1564
        %v1566 = vshll.u32 2131351028, %v1557
        %v1567 = vshrl.u32 2102212464, %v1558
        %v1568 = vor.u32 %v1566, %v1567
        %v1569 = vshll.u32 2102212464, %v1557
        %v1570 = vshrl.u32 920167782, %v1558
        %v1571 = vor.u32 %v1569, %v1570
        %v1572 = vshll.u32 920167782, %v1557
        %v1573 = vshrl.u32 1326507024, %v1558
        %v1574 = vor.u32 %v1572, %v1573
        %vm1575 = vcmp.lt.s32.totalorder %v1556, 1
        %vm1576 = vcmp.lt.s32.totalorder %v1556, 2
        %vm1577 = vcmp.lt.s32.totalorder %v1556, 3
        %vm1578 = vcmp.lt.s32.totalorder %v1556, 4
        %v1579 = vsel %vm1575, %v1559, %v1562
        %v1580 = vsel %vm1578, %v1568, 2102212464
        %v1581 = vsel %vm1577, %v1565, %v1580
        %v1582 = vsel %vm1576, %v1579, %v1581
        %v1583 = vsel %vm1575, %v1562, %v1565
        %v1584 = vsel %vm1578, %v1571, 920167782
        %v1585 = vsel %vm1577, %v1568, %v1584
        %v1586 = vsel %vm1576, %v1583, %v1585
        %v1587 = vsel %vm1575, %v1565, %v1568
        %v1588 = vsel %vm1578, %v1574, 1326507024
        %v1589 = vsel %vm1577, %v1571, %v1588
        %v1590 = vsel %vm1576, %v1587, %v1589
        %v1591 = vshll.u32 %v1551, 8
        %v1592 = vmul.u32.u64.compose %v1591, %v1590
        %v1593 = vextract.low.u32 %v1592
        %v1594 = vextract.high.u32 %v1592
        %v1595 = vmul.u32.u64.compose %v1591, %v1586
        %v1596 = vextract.low.u32 %v1595
        %v1597 = vextract.high.u32 %v1595
        %v1598 = vmul.u32 %v1591, %v1582
        %v1599 = vadd.s32 %v1594, %v1596
        %vm1600 = vc.u32 %v1594, %v1596
        %v1601 = vadd.s32 %v1597, 1
        %v1602 = vsel %vm1600, %v1601, %v1597
        %v1603 = vadd.s32 %v1598, %v1602
        %v1604 = vadd.s32 %v1603, 536870912
        %v1605 = vshrl.u32 %v1604, 30
        %v1606 = vshll.u32 %v1605, 30
        %v1607 = vsub.s32 %v1603, %v1606
        %vm1608 = vcmp.lt.s32.totalorder %v1607, 0
        %v1609 = vsub.s32 0, %v1607
        %v1610 = vsel %vm1608, %v1609, %v1607
        %v1611 = vclz %v1610
        %v1612 = vsub.s32 %v1611, 2
        %vm1613 = vcmp.gt.s32.totalorder 0, %v1612
        %v1614 = vsel %vm1613, 0, %v1612
        %v1615 = vsub.s32 32, %v1614
        %v1616 = vshll.u32 %v1607, %v1614
        %v1617 = vshrl.u32 %v1599, %v1615
        %v1618 = vor.u32 %v1616, %v1617
        %v1619 = vsub.s32 4294967266, %v1614
        %v1620 = vadd.s32 %v1619, 127
        %v1621 = vshll.u32 %v1620, 23
        %v1622 = vor.u32 4788187, %v1621
        %v1623 = vand.u32 2147483647, %v1622
        %v1625 = vcvt.s32.f32 %v1618
        %v1626 = vmul.f32 %v1625, %v1623
        %v1627 = vxor.u32 %v1626, 2147483648
        %v1628 = vsel %vm1545, %v1627, %v1626
        %v1629 = vsub.s32 4, %v1605
        %v1630 = vsel %vm1545, %v1629, %v1605
        %v1631 = vsel %vm1544, %v1539, %v1628
        %v1632 = vsel %vm1544, 0, %v1630
        %v1633 = vcosq.f32.pop %v1631
        %v1634 = vsinq.f32.pop %v1631
        %vm1635 = vweird.f32 %v1539
        %v1636 = vadd.s32 %v1632, 3
        %v1637 = vand.u32 %v1636, 3
        %vm1638 = vcmp.lt.s32.totalorder %v1637, 2
        %vm1639 = vcmp.eq.s32.totalorder %v1637, 0
        %v1640 = vxor.u32 %v1634, 2147483648
        %v1641 = vsel %vm1639, %v1633, %v1640
        %vm1642 = vcmp.eq.s32.totalorder %v1637, 2
        %v1643 = vxor.u32 %v1633, 2147483648
        %v1644 = vsel %vm1642, %v1643, %v1634
        %v1645 = vsel %vm1638, %v1641, %v1644
        %v1646 = vsel %vm1635, nan, %v1645
        %v1647 = vand.u32 2147483647, %v1540
        %vm1648 = vcmp.le.f32.partialorder %v1647, 0.7853982
        %vm1649 = vcmp.lt.s32.totalorder %v1540, 0
        %v1650 = vand.u32 %v1540, 2139095040
        %v1651 = vshrl.u32 %v1650, 23
        %v1652 = vsub.s32 %v1651, 127
        %v1653 = vand.u32 2147483647, %v1540
        %v1654 = vand.u32 %v1653, 8388607
        %v1655 = vor.u32 %v1654, 8388608
        %v1656 = vsub.s32 0, %v1655
        %v1657 = vadd.s32 %v1652, 1
        %vm1658 = vcmp.gt.s32.totalorder %v1657, 0
        %v1659 = vsel %vm1658, %v1657, 0
        %v1660 = vshrl.u32 %v1659, 5
        %v1661 = vand.u32 %v1659, 31
        %v1662 = vsub.s32 32, %v1661
        %v1663 = vshrl.u32 683565275, %v1662
        %v1664 = vshll.u32 683565275, %v1661
        %v1665 = vshrl.u32 2475754826, %v1662
        %v1666 = vor.u32 %v1664, %v1665
        %v1667 = vshll.u32 2475754826, %v1661
        %v1668 = vshrl.u32 2131351028, %v1662
        %v1669 = vor.u32 %v1667, %v1668
        %v1670 = vshll.u32 2131351028, %v1661
        %v1671 = vshrl.u32 2102212464, %v1662
        %v1672 = vor.u32 %v1670, %v1671
        %v1673 = vshll.u32 2102212464, %v1661
        %v1674 = vshrl.u32 920167782, %v1662
        %v1675 = vor.u32 %v1673, %v1674
        %v1676 = vshll.u32 920167782, %v1661
        %v1677 = vshrl.u32 1326507024, %v1662
        %v1678 = vor.u32 %v1676, %v1677
        %vm1679 = vcmp.lt.s32.totalorder %v1660, 1
        %vm1680 = vcmp.lt.s32.totalorder %v1660, 2
        %vm1681 = vcmp.lt.s32.totalorder %v1660, 3
        %vm1682 = vcmp.lt.s32.totalorder %v1660, 4
        %v1683 = vsel %vm1679, %v1663, %v1666
        %v1684 = vsel %vm1682, %v1672, 2102212464
        %v1685 = vsel %vm1681, %v1669, %v1684
        %v1686 = vsel %vm1680, %v1683, %v1685
        %v1687 = vsel %vm1679, %v1666, %v1669
        %v1688 = vsel %vm1682, %v1675, 920167782
        %v1689 = vsel %vm1681, %v1672, %v1688
        %v1690 = vsel %vm1680, %v1687, %v1689
        %v1691 = vsel %vm1679, %v1669, %v1672
        %v1692 = vsel %vm1682, %v1678, 1326507024
        %v1693 = vsel %vm1681, %v1675, %v1692
        %v1694 = vsel %vm1680, %v1691, %v1693
        %v1695 = vshll.u32 %v1655, 8
        %v1696 = vmul.u32.u64.compose %v1695, %v1694
        %v1697 = vextract.low.u32 %v1696
        %v1698 = vextract.high.u32 %v1696
        %v1699 = vmul.u32.u64.compose %v1695, %v1690
        %v1700 = vextract.low.u32 %v1699
        %v1701 = vextract.high.u32 %v1699
        %v1702 = vmul.u32 %v1695, %v1686
        %v1703 = vadd.s32 %v1698, %v1700
        %vm1704 = vc.u32 %v1698, %v1700
        %v1705 = vadd.s32 %v1701, 1
        %v1706 = vsel %vm1704, %v1705, %v1701
        %v1707 = vadd.s32 %v1702, %v1706
        %v1708 = vadd.s32 %v1707, 536870912
        %v1709 = vshrl.u32 %v1708, 30
        %v1710 = vshll.u32 %v1709, 30
        %v1711 = vsub.s32 %v1707, %v1710
        %vm1712 = vcmp.lt.s32.totalorder %v1711, 0
        %v1713 = vsub.s32 0, %v1711
        %v1714 = vsel %vm1712, %v1713, %v1711
        %v1715 = vclz %v1714
        %v1716 = vsub.s32 %v1715, 2
        %vm1717 = vcmp.gt.s32.totalorder 0, %v1716
        %v1718 = vsel %vm1717, 0, %v1716
        %v1719 = vsub.s32 32, %v1718
        %v1720 = vshll.u32 %v1711, %v1718
        %v1721 = vshrl.u32 %v1703, %v1719
        %v1722 = vor.u32 %v1720, %v1721
        %v1723 = vsub.s32 4294967266, %v1718
        %v1724 = vadd.s32 %v1723, 127
        %v1725 = vshll.u32 %v1724, 23
        %v1726 = vor.u32 4788187, %v1725
        %v1727 = vand.u32 2147483647, %v1726
        %v1729 = vcvt.s32.f32 %v1722
        %v1730 = vmul.f32 %v1729, %v1727
        %v1731 = vxor.u32 %v1730, 2147483648
        %v1732 = vsel %vm1649, %v1731, %v1730
        %v1733 = vsub.s32 4, %v1709
        %v1734 = vsel %vm1649, %v1733, %v1709
        %v1735 = vsel %vm1648, %v1540, %v1732
        %v1736 = vsel %vm1648, 0, %v1734
        %v1737 = vcosq.f32.pop %v1735
        %v1738 = vsinq.f32.pop %v1735
        %vm1739 = vweird.f32 %v1540
        %v1740 = vadd.s32 %v1736, 3
        %v1741 = vand.u32 %v1740, 3
        %vm1742 = vcmp.lt.s32.totalorder %v1741, 2
        %vm1743 = vcmp.eq.s32.totalorder %v1741, 0
        %v1744 = vxor.u32 %v1738, 2147483648
        %v1745 = vsel %vm1743, %v1737, %v1744
        %vm1746 = vcmp.eq.s32.totalorder %v1741, 2
        %v1747 = vxor.u32 %v1737, 2147483648
        %v1748 = vsel %vm1746, %v1747, %v1738
        %v1749 = vsel %vm1742, %v1745, %v1748
        %v1750 = vsel %vm1739, nan, %v1749
        %v1751 = vand.u32 2147483647, %v1541
        %vm1752 = vcmp.le.f32.partialorder %v1751, 0.7853982
        %vm1753 = vcmp.lt.s32.totalorder %v1541, 0
        %v1754 = vand.u32 %v1541, 2139095040
        %v1755 = vshrl.u32 %v1754, 23
        %v1756 = vsub.s32 %v1755, 127
        %v1757 = vand.u32 2147483647, %v1541
        %v1758 = vand.u32 %v1757, 8388607
        %v1759 = vor.u32 %v1758, 8388608
        %v1760 = vsub.s32 0, %v1759
        %v1761 = vadd.s32 %v1756, 1
        %vm1762 = vcmp.gt.s32.totalorder %v1761, 0
        %v1763 = vsel %vm1762, %v1761, 0
        %v1764 = vshrl.u32 %v1763, 5
        %v1765 = vand.u32 %v1763, 31
        %v1766 = vsub.s32 32, %v1765
        %v1767 = vshrl.u32 683565275, %v1766
        %v1768 = vshll.u32 683565275, %v1765
        %v1769 = vshrl.u32 2475754826, %v1766
        %v1770 = vor.u32 %v1768, %v1769
        %v1771 = vshll.u32 2475754826, %v1765
        %v1772 = vshrl.u32 2131351028, %v1766
        %v1773 = vor.u32 %v1771, %v1772
        %v1774 = vshll.u32 2131351028, %v1765
        %v1775 = vshrl.u32 2102212464, %v1766
        %v1776 = vor.u32 %v1774, %v1775
        %v1777 = vshll.u32 2102212464, %v1765
        %v1778 = vshrl.u32 920167782, %v1766
        %v1779 = vor.u32 %v1777, %v1778
        %v1780 = vshll.u32 920167782, %v1765
        %v1781 = vshrl.u32 1326507024, %v1766
        %v1782 = vor.u32 %v1780, %v1781
        %vm1783 = vcmp.lt.s32.totalorder %v1764, 1
        %vm1784 = vcmp.lt.s32.totalorder %v1764, 2
        %vm1785 = vcmp.lt.s32.totalorder %v1764, 3
        %vm1786 = vcmp.lt.s32.totalorder %v1764, 4
        %v1787 = vsel %vm1783, %v1767, %v1770
        %v1788 = vsel %vm1786, %v1776, 2102212464
        %v1789 = vsel %vm1785, %v1773, %v1788
        %v1790 = vsel %vm1784, %v1787, %v1789
        %v1791 = vsel %vm1783, %v1770, %v1773
        %v1792 = vsel %vm1786, %v1779, 920167782
        %v1793 = vsel %vm1785, %v1776, %v1792
        %v1794 = vsel %vm1784, %v1791, %v1793
        %v1795 = vsel %vm1783, %v1773, %v1776
        %v1796 = vsel %vm1786, %v1782, 1326507024
        %v1797 = vsel %vm1785, %v1779, %v1796
        %v1798 = vsel %vm1784, %v1795, %v1797
        %v1799 = vshll.u32 %v1759, 8
        %v1800 = vmul.u32.u64.compose %v1799, %v1798
        %v1801 = vextract.low.u32 %v1800
        %v1802 = vextract.high.u32 %v1800
        %v1803 = vmul.u32.u64.compose %v1799, %v1794
        %v1804 = vextract.low.u32 %v1803
        %v1805 = vextract.high.u32 %v1803
        %v1806 = vmul.u32 %v1799, %v1790
        %v1807 = vadd.s32 %v1802, %v1804
        %vm1808 = vc.u32 %v1802, %v1804
        %v1809 = vadd.s32 %v1805, 1
        %v1810 = vsel %vm1808, %v1809, %v1805
        %v1811 = vadd.s32 %v1806, %v1810
        %v1812 = vadd.s32 %v1811, 536870912
        %v1813 = vshrl.u32 %v1812, 30
        %v1814 = vshll.u32 %v1813, 30
        %v1815 = vsub.s32 %v1811, %v1814
        %vm1816 = vcmp.lt.s32.totalorder %v1815, 0
        %v1817 = vsub.s32 0, %v1815
        %v1818 = vsel %vm1816, %v1817, %v1815
        %v1819 = vclz %v1818
        %v1820 = vsub.s32 %v1819, 2
        %vm1821 = vcmp.gt.s32.totalorder 0, %v1820
        %v1822 = vsel %vm1821, 0, %v1820
        %v1823 = vsub.s32 32, %v1822
        %v1824 = vshll.u32 %v1815, %v1822
        %v1825 = vshrl.u32 %v1807, %v1823
        %v1826 = vor.u32 %v1824, %v1825
        %v1827 = vsub.s32 4294967266, %v1822
        %v1828 = vadd.s32 %v1827, 127
        %v1829 = vshll.u32 %v1828, 23
        %v1830 = vor.u32 4788187, %v1829
        %v1831 = vand.u32 2147483647, %v1830
        %v1833 = vcvt.s32.f32 %v1826
        %v1834 = vmul.f32 %v1833, %v1831
        %v1835 = vxor.u32 %v1834, 2147483648
        %v1836 = vsel %vm1753, %v1835, %v1834
        %v1837 = vsub.s32 4, %v1813
        %v1838 = vsel %vm1753, %v1837, %v1813
        %v1839 = vsel %vm1752, %v1541, %v1836
        %v1840 = vsel %vm1752, 0, %v1838
        %v1841 = vcosq.f32.pop %v1839
        %v1842 = vsinq.f32.pop %v1839
        %vm1843 = vweird.f32 %v1541
        %v1844 = vadd.s32 %v1840, 3
        %v1845 = vand.u32 %v1844, 3
        %vm1846 = vcmp.lt.s32.totalorder %v1845, 2
        %vm1847 = vcmp.eq.s32.totalorder %v1845, 0
        %v1848 = vxor.u32 %v1842, 2147483648
        %v1849 = vsel %vm1847, %v1841, %v1848
        %vm1850 = vcmp.eq.s32.totalorder %v1845, 2
        %v1851 = vxor.u32 %v1841, 2147483648
        %v1852 = vsel %vm1850, %v1851, %v1842
        %v1853 = vsel %vm1846, %v1849, %v1852
        %v1854 = vsel %vm1843, nan, %v1853
        %v1855 = vand.u32 2147483647, %v1542
        %vm1856 = vcmp.le.f32.partialorder %v1855, 0.7853982
        %vm1857 = vcmp.lt.s32.totalorder %v1542, 0
        %v1858 = vand.u32 %v1542, 2139095040
        %v1859 = vshrl.u32 %v1858, 23
        %v1860 = vsub.s32 %v1859, 127
        %v1861 = vand.u32 2147483647, %v1542
        %v1862 = vand.u32 %v1861, 8388607
        %v1863 = vor.u32 %v1862, 8388608
        %v1864 = vsub.s32 0, %v1863
        %v1865 = vadd.s32 %v1860, 1
        %vm1866 = vcmp.gt.s32.totalorder %v1865, 0
        %v1867 = vsel %vm1866, %v1865, 0
        %v1868 = vshrl.u32 %v1867, 5
        %v1869 = vand.u32 %v1867, 31
        %v1870 = vsub.s32 32, %v1869
        %v1871 = vshrl.u32 683565275, %v1870
        %v1872 = vshll.u32 683565275, %v1869
        %v1873 = vshrl.u32 2475754826, %v1870
        %v1874 = vor.u32 %v1872, %v1873
        %v1875 = vshll.u32 2475754826, %v1869
        %v1876 = vshrl.u32 2131351028, %v1870
        %v1877 = vor.u32 %v1875, %v1876
        %v1878 = vshll.u32 2131351028, %v1869
        %v1879 = vshrl.u32 2102212464, %v1870
        %v1880 = vor.u32 %v1878, %v1879
        %v1881 = vshll.u32 2102212464, %v1869
        %v1882 = vshrl.u32 920167782, %v1870
        %v1883 = vor.u32 %v1881, %v1882
        %v1884 = vshll.u32 920167782, %v1869
        %v1885 = vshrl.u32 1326507024, %v1870
        %v1886 = vor.u32 %v1884, %v1885
        %vm1887 = vcmp.lt.s32.totalorder %v1868, 1
        %vm1888 = vcmp.lt.s32.totalorder %v1868, 2
        %vm1889 = vcmp.lt.s32.totalorder %v1868, 3
        %vm1890 = vcmp.lt.s32.totalorder %v1868, 4
        %v1891 = vsel %vm1887, %v1871, %v1874
        %v1892 = vsel %vm1890, %v1880, 2102212464
        %v1893 = vsel %vm1889, %v1877, %v1892
        %v1894 = vsel %vm1888, %v1891, %v1893
        %v1895 = vsel %vm1887, %v1874, %v1877
        %v1896 = vsel %vm1890, %v1883, 920167782
        %v1897 = vsel %vm1889, %v1880, %v1896
        %v1898 = vsel %vm1888, %v1895, %v1897
        %v1899 = vsel %vm1887, %v1877, %v1880
        %v1900 = vsel %vm1890, %v1886, 1326507024
        %v1901 = vsel %vm1889, %v1883, %v1900
        %v1902 = vsel %vm1888, %v1899, %v1901
        %v1903 = vshll.u32 %v1863, 8
        %v1904 = vmul.u32.u64.compose %v1903, %v1902
        %v1905 = vextract.low.u32 %v1904
        %v1906 = vextract.high.u32 %v1904
        %v1907 = vmul.u32.u64.compose %v1903, %v1898
        %v1908 = vextract.low.u32 %v1907
        %v1909 = vextract.high.u32 %v1907
        %v1910 = vmul.u32 %v1903, %v1894
        %v1911 = vadd.s32 %v1906, %v1908
        %vm1912 = vc.u32 %v1906, %v1908
        %v1913 = vadd.s32 %v1909, 1
        %v1914 = vsel %vm1912, %v1913, %v1909
        %v1915 = vadd.s32 %v1910, %v1914
        %v1916 = vadd.s32 %v1915, 536870912
        %v1917 = vshrl.u32 %v1916, 30
        %v1918 = vshll.u32 %v1917, 30
        %v1919 = vsub.s32 %v1915, %v1918
        %vm1920 = vcmp.lt.s32.totalorder %v1919, 0
        %v1921 = vsub.s32 0, %v1919
        %v1922 = vsel %vm1920, %v1921, %v1919
        %v1923 = vclz %v1922
        %v1924 = vsub.s32 %v1923, 2
        %vm1925 = vcmp.gt.s32.totalorder 0, %v1924
        %v1926 = vsel %vm1925, 0, %v1924
        %v1927 = vsub.s32 32, %v1926
        %v1928 = vshll.u32 %v1919, %v1926
        %v1929 = vshrl.u32 %v1911, %v1927
        %v1930 = vor.u32 %v1928, %v1929
        %v1931 = vsub.s32 4294967266, %v1926
        %v1932 = vadd.s32 %v1931, 127
        %v1933 = vshll.u32 %v1932, 23
        %v1934 = vor.u32 4788187, %v1933
        %v1935 = vand.u32 2147483647, %v1934
        %v1937 = vcvt.s32.f32 %v1930
        %v1938 = vmul.f32 %v1937, %v1935
        %v1939 = vxor.u32 %v1938, 2147483648
        %v1940 = vsel %vm1857, %v1939, %v1938
        %v1941 = vsub.s32 4, %v1917
        %v1942 = vsel %vm1857, %v1941, %v1917
        %v1943 = vsel %vm1856, %v1542, %v1940
        %v1944 = vsel %vm1856, 0, %v1942
        %v1945 = vcosq.f32.pop %v1943
        %v1946 = vsinq.f32.pop %v1943
        %vm1947 = vweird.f32 %v1542
        %v1948 = vadd.s32 %v1944, 3
        %v1949 = vand.u32 %v1948, 3
        %vm1950 = vcmp.lt.s32.totalorder %v1949, 2
        %vm1951 = vcmp.eq.s32.totalorder %v1949, 0
        %v1952 = vxor.u32 %v1946, 2147483648
        %v1953 = vsel %vm1951, %v1945, %v1952
        %vm1954 = vcmp.eq.s32.totalorder %v1949, 2
        %v1955 = vxor.u32 %v1945, 2147483648
        %v1956 = vsel %vm1954, %v1955, %v1946
        %v1957 = vsel %vm1950, %v1953, %v1956
        %v1958 = vsel %vm1947, nan, %v1957
        %v1959 = vmul.f32 %v1646, 0.1
        %v1960 = vmul.f32 %v1750, 0.1
        %v1961 = vmul.f32 %v1854, 0.1
        %v1962 = vmul.f32 %v1958, 0.1
        %v1963 = vmul.f32 %v284, 32.0
        %v1964 = vadd.f32 %v285, %v1963
        %1966 = vrot.lane.b32.xlu0 %v1964, 113
        %v1967 = vpop.permute.xlu0 %1966
        %v1969 = vadd.f32 %v1492, %v1967
        %v1970 = vfloor.f32 %v1969
        %v1971 = vsub.f32 %v1969, %v1970
        %vm1972 = vcmask 7168
        %1973 = vst.msk [vmem:[#allocation2] sm:$0xff] %vm1972, %v1971
        %v1974 = vlaneseq
        %v1975 = vshrl.u32 %v1974, 7
        %v1976 = vlaneseq
        %v1977 = vand.u32 %v1976, 127
        %v1978 = vadd.s32 %v1977, 128
        %s1979 = smul.u32 %s29, 3
        %s1980 = sadd.s32 %s1979, %s30
        %s1981 = smul.u32 %s1980, 8
        %v1982 = vstv %s1981
        %v1983 = vadd.s32 %v1982, %v1975
        %v1984 = vmul.u32 %v1983, 256
        %v1985 = vadd.s32 %v1984, %v1977
        %v1986 = vadd.s32 %v1984, %v1978
        %s1987 = sld [smem:[#allocation4]]
        %v1988 = vstv %s1987
        %v1989 = vadd.s32 %v1985, %v1988
        %v1990 = vadd.s32 %v1986, %v1988
        %v1991 = vshrl.u32 %v1989, 16
        %v1992 = vshrl.u32 %v1990, 16
        %v1993 = vxor.u32 %v1991, %v1989
        %v1994 = vxor.u32 %v1992, %v1990
        %v1995 = vmul.u32 %v1993, 73244475
        %v1996 = vmul.u32 %v1994, 73244475
        %v1997 = vshrl.u32 %v1995, 16
        %v1998 = vshrl.u32 %v1996, 16
        %v1999 = vxor.u32 %v1997, %v1995
        %v2000 = vxor.u32 %v1998, %v1996
        %v2001 = vmul.u32 %v1999, 73244475
        %v2002 = vmul.u32 %v2000, 73244475
        %v2003 = vshrl.u32 %v2001, 16
        %v2004 = vshrl.u32 %v2002, 16
        %v2005 = vxor.u32 %v2003, %v2001
        %v2006 = vxor.u32 %v2004, %v2002
        %v2007 = vxor.u32 %v2005, 1759714724
        %v2008 = vxor.u32 %v2006, 1759714724
        %v2009 = vshrl.u32 %v2007, 16
        %v2010 = vshrl.u32 %v2008, 16
        %v2011 = vxor.u32 %v2009, %v2007
        %v2012 = vxor.u32 %v2010, %v2008
        %v2013 = vmul.u32 %v2011, 73244475
        %v2014 = vmul.u32 %v2012, 73244475
        %v2015 = vshrl.u32 %v2013, 16
        %v2016 = vshrl.u32 %v2014, 16
        %v2017 = vxor.u32 %v2015, %v2013
        %v2018 = vxor.u32 %v2016, %v2014
        %v2019 = vmul.u32 %v2017, 73244475
        %v2020 = vmul.u32 %v2018, 73244475
        %v2021 = vshrl.u32 %v2019, 16
        %v2022 = vshrl.u32 %v2020, 16
        %v2023 = vxor.u32 %v2021, %v2019
        %v2024 = vxor.u32 %v2022, %v2020
        %v2025 = vand.u32 %v2005, 8388607
        %v2026 = vand.u32 %v2006, 8388607
        %v2027 = vcvt.s32.f32 %v2025
        %v2028 = vcvt.s32.f32 %v2026
        %v2029 = vadd.f32 %v2027, 1.0
        %v2030 = vadd.f32 %v2028, 1.0
        %v2031 = vmul.f32 %v2029, 1.1920929e-07
        %v2032 = vmul.f32 %v2030, 1.1920929e-07
        %v2033 = vand.u32 %v2023, 8388607
        %v2034 = vand.u32 %v2024, 8388607
        %v2035 = vcvt.s32.f32 %v2033
        %v2036 = vcvt.s32.f32 %v2034
        %v2037 = vmul.f32 %v2035, 1.1920929e-07
        %v2038 = vmul.f32 %v2036, 1.1920929e-07
        %v2039 = vlog2.pop %v2031
        %v2040 = vmul.f32 %v2039, 0.6931472
        %v2041 = vlog2.pop %v2032
        %v2042 = vmul.f32 %v2041, 0.6931472
        %v2043 = vmul.f32 %v2040, -2.0
        %v2044 = vmul.f32 %v2042, -2.0
        %v2045 = vrsqrt.pop %v2043
        %v2046 = vmul.f32 %v2043, %v2045
        %vm2047 = vcmp.eq.f32.partialorder %v2043, inf
        %v2048 = vsel %vm2047, %v2043, %v2046
        %vm2049 = vcmp.eq.f32.partialorder %v2043, 0.0
        %v2050 = vand.u32 %v2043, 2147483648
        %v2051 = vsel %vm2049, %v2050, %v2048
        %v2052 = vrsqrt.pop %v2044
        %v2053 = vmul.f32 %v2044, %v2052
        %vm2054 = vcmp.eq.f32.partialorder %v2044, inf
        %v2055 = vsel %vm2054, %v2044, %v2053
        %vm2056 = vcmp.eq.f32.partialorder %v2044, 0.0
        %v2057 = vand.u32 %v2044, 2147483648
        %v2058 = vsel %vm2056, %v2057, %v2055
        %v2059 = vmul.f32 %v2037, 6.2831855
        %v2060 = vmul.f32 %v2038, 6.2831855
        %v2061 = vand.u32 2147483647, %v2059
        %vm2062 = vcmp.le.f32.partialorder %v2061, 0.7853982
        %vm2063 = vcmp.lt.s32.totalorder %v2059, 0
        %v2064 = vand.u32 %v2059, 2139095040
        %v2065 = vshrl.u32 %v2064, 23
        %v2066 = vsub.s32 %v2065, 127
        %v2067 = vand.u32 2147483647, %v2059
        %v2068 = vand.u32 %v2067, 8388607
        %v2069 = vor.u32 %v2068, 8388608
        %v2070 = vsub.s32 0, %v2069
        %v2071 = vadd.s32 %v2066, 1
        %vm2072 = vcmp.gt.s32.totalorder %v2071, 0
        %v2073 = vsel %vm2072, %v2071, 0
        %v2074 = vshrl.u32 %v2073, 5
        %v2075 = vand.u32 %v2073, 31
        %v2076 = vsub.s32 32, %v2075
        %v2077 = vshrl.u32 683565275, %v2076
        %v2078 = vshll.u32 683565275, %v2075
        %v2079 = vshrl.u32 2475754826, %v2076
        %v2080 = vor.u32 %v2078, %v2079
        %v2081 = vshll.u32 2475754826, %v2075
        %v2082 = vshrl.u32 2131351028, %v2076
        %v2083 = vor.u32 %v2081, %v2082
        %v2084 = vshll.u32 2131351028, %v2075
        %v2085 = vshrl.u32 2102212464, %v2076
        %v2086 = vor.u32 %v2084, %v2085
        %v2087 = vshll.u32 2102212464, %v2075
        %v2088 = vshrl.u32 920167782, %v2076
        %v2089 = vor.u32 %v2087, %v2088
        %v2090 = vshll.u32 920167782, %v2075
        %v2091 = vshrl.u32 1326507024, %v2076
        %v2092 = vor.u32 %v2090, %v2091
        %vm2093 = vcmp.lt.s32.totalorder %v2074, 1
        %vm2094 = vcmp.lt.s32.totalorder %v2074, 2
        %vm2095 = vcmp.lt.s32.totalorder %v2074, 3
        %vm2096 = vcmp.lt.s32.totalorder %v2074, 4
        %v2097 = vsel %vm2093, %v2077, %v2080
        %v2098 = vsel %vm2096, %v2086, 2102212464
        %v2099 = vsel %vm2095, %v2083, %v2098
        %v2100 = vsel %vm2094, %v2097, %v2099
        %v2101 = vsel %vm2093, %v2080, %v2083
        %v2102 = vsel %vm2096, %v2089, 920167782
        %v2103 = vsel %vm2095, %v2086, %v2102
        %v2104 = vsel %vm2094, %v2101, %v2103
        %v2105 = vsel %vm2093, %v2083, %v2086
        %v2106 = vsel %vm2096, %v2092, 1326507024
        %v2107 = vsel %vm2095, %v2089, %v2106
        %v2108 = vsel %vm2094, %v2105, %v2107
        %v2109 = vshll.u32 %v2069, 8
        %v2110 = vmul.u32.u64.compose %v2109, %v2108
        %v2111 = vextract.low.u32 %v2110
        %v2112 = vextract.high.u32 %v2110
        %v2113 = vmul.u32.u64.compose %v2109, %v2104
        %v2114 = vextract.low.u32 %v2113
        %v2115 = vextract.high.u32 %v2113
        %v2116 = vmul.u32 %v2109, %v2100
        %v2117 = vadd.s32 %v2112, %v2114
        %vm2118 = vc.u32 %v2112, %v2114
        %v2119 = vadd.s32 %v2115, 1
        %v2120 = vsel %vm2118, %v2119, %v2115
        %v2121 = vadd.s32 %v2116, %v2120
        %v2122 = vadd.s32 %v2121, 536870912
        %v2123 = vshrl.u32 %v2122, 30
        %v2124 = vshll.u32 %v2123, 30
        %v2125 = vsub.s32 %v2121, %v2124
        %vm2126 = vcmp.lt.s32.totalorder %v2125, 0
        %v2127 = vsub.s32 0, %v2125
        %v2128 = vsel %vm2126, %v2127, %v2125
        %v2129 = vclz %v2128
        %v2130 = vsub.s32 %v2129, 2
        %vm2131 = vcmp.gt.s32.totalorder 0, %v2130
        %v2132 = vsel %vm2131, 0, %v2130
        %v2133 = vsub.s32 32, %v2132
        %v2134 = vshll.u32 %v2125, %v2132
        %v2135 = vshrl.u32 %v2117, %v2133
        %v2136 = vor.u32 %v2134, %v2135
        %v2137 = vsub.s32 4294967266, %v2132
        %v2138 = vadd.s32 %v2137, 127
        %v2139 = vshll.u32 %v2138, 23
        %v2140 = vor.u32 4788187, %v2139
        %v2141 = vand.u32 2147483647, %v2140
        %v2143 = vcvt.s32.f32 %v2136
        %v2144 = vmul.f32 %v2143, %v2141
        %v2145 = vxor.u32 %v2144, 2147483648
        %v2146 = vsel %vm2063, %v2145, %v2144
        %v2147 = vsub.s32 4, %v2123
        %v2148 = vsel %vm2063, %v2147, %v2123
        %v2149 = vsel %vm2062, %v2059, %v2146
        %v2150 = vsel %vm2062, 0, %v2148
        %v2151 = vcosq.f32.pop %v2149
        %v2152 = vsinq.f32.pop %v2149
        %vm2153 = vweird.f32 %v2059
        %v2154 = vand.u32 %v2150, 3
        %vm2155 = vcmp.lt.s32.totalorder %v2154, 2
        %vm2156 = vcmp.eq.s32.totalorder %v2154, 0
        %v2157 = vxor.u32 %v2152, 2147483648
        %v2158 = vsel %vm2156, %v2151, %v2157
        %vm2159 = vcmp.eq.s32.totalorder %v2154, 2
        %v2160 = vxor.u32 %v2151, 2147483648
        %v2161 = vsel %vm2159, %v2160, %v2152
        %v2162 = vsel %vm2155, %v2158, %v2161
        %v2163 = vsel %vm2153, nan, %v2162
        %v2164 = vand.u32 2147483647, %v2060
        %vm2165 = vcmp.le.f32.partialorder %v2164, 0.7853982
        %vm2166 = vcmp.lt.s32.totalorder %v2060, 0
        %v2167 = vand.u32 %v2060, 2139095040
        %v2168 = vshrl.u32 %v2167, 23
        %v2169 = vsub.s32 %v2168, 127
        %v2170 = vand.u32 2147483647, %v2060
        %v2171 = vand.u32 %v2170, 8388607
        %v2172 = vor.u32 %v2171, 8388608
        %v2173 = vsub.s32 0, %v2172
        %v2174 = vadd.s32 %v2169, 1
        %vm2175 = vcmp.gt.s32.totalorder %v2174, 0
        %v2176 = vsel %vm2175, %v2174, 0
        %v2177 = vshrl.u32 %v2176, 5
        %v2178 = vand.u32 %v2176, 31
        %v2179 = vsub.s32 32, %v2178
        %v2180 = vshrl.u32 683565275, %v2179
        %v2181 = vshll.u32 683565275, %v2178
        %v2182 = vshrl.u32 2475754826, %v2179
        %v2183 = vor.u32 %v2181, %v2182
        %v2184 = vshll.u32 2475754826, %v2178
        %v2185 = vshrl.u32 2131351028, %v2179
        %v2186 = vor.u32 %v2184, %v2185
        %v2187 = vshll.u32 2131351028, %v2178
        %v2188 = vshrl.u32 2102212464, %v2179
        %v2189 = vor.u32 %v2187, %v2188
        %v2190 = vshll.u32 2102212464, %v2178
        %v2191 = vshrl.u32 920167782, %v2179
        %v2192 = vor.u32 %v2190, %v2191
        %v2193 = vshll.u32 920167782, %v2178
        %v2194 = vshrl.u32 1326507024, %v2179
        %v2195 = vor.u32 %v2193, %v2194
        %vm2196 = vcmp.lt.s32.totalorder %v2177, 1
        %vm2197 = vcmp.lt.s32.totalorder %v2177, 2
        %vm2198 = vcmp.lt.s32.totalorder %v2177, 3
        %vm2199 = vcmp.lt.s32.totalorder %v2177, 4
        %v2200 = vsel %vm2196, %v2180, %v2183
        %v2201 = vsel %vm2199, %v2189, 2102212464
        %v2202 = vsel %vm2198, %v2186, %v2201
        %v2203 = vsel %vm2197, %v2200, %v2202
        %v2204 = vsel %vm2196, %v2183, %v2186
        %v2205 = vsel %vm2199, %v2192, 920167782
        %v2206 = vsel %vm2198, %v2189, %v2205
        %v2207 = vsel %vm2197, %v2204, %v2206
        %v2208 = vsel %vm2196, %v2186, %v2189
        %v2209 = vsel %vm2199, %v2195, 1326507024
        %v2210 = vsel %vm2198, %v2192, %v2209
        %v2211 = vsel %vm2197, %v2208, %v2210
        %v2212 = vshll.u32 %v2172, 8
        %v2213 = vmul.u32.u64.compose %v2212, %v2211
        %v2214 = vextract.low.u32 %v2213
        %v2215 = vextract.high.u32 %v2213
        %v2216 = vmul.u32.u64.compose %v2212, %v2207
        %v2217 = vextract.low.u32 %v2216
        %v2218 = vextract.high.u32 %v2216
        %v2219 = vmul.u32 %v2212, %v2203
        %v2220 = vadd.s32 %v2215, %v2217
        %vm2221 = vc.u32 %v2215, %v2217
        %v2222 = vadd.s32 %v2218, 1
        %v2223 = vsel %vm2221, %v2222, %v2218
        %v2224 = vadd.s32 %v2219, %v2223
        %v2225 = vadd.s32 %v2224, 536870912
        %v2226 = vshrl.u32 %v2225, 30
        %v2227 = vshll.u32 %v2226, 30
        %v2228 = vsub.s32 %v2224, %v2227
        %vm2229 = vcmp.lt.s32.totalorder %v2228, 0
        %v2230 = vsub.s32 0, %v2228
        %v2231 = vsel %vm2229, %v2230, %v2228
        %v2232 = vclz %v2231
        %v2233 = vsub.s32 %v2232, 2
        %vm2234 = vcmp.gt.s32.totalorder 0, %v2233
        %v2235 = vsel %vm2234, 0, %v2233
        %v2236 = vsub.s32 32, %v2235
        %v2237 = vshll.u32 %v2228, %v2235
        %v2238 = vshrl.u32 %v2220, %v2236
        %v2239 = vor.u32 %v2237, %v2238
        %v2240 = vsub.s32 4294967266, %v2235
        %v2241 = vadd.s32 %v2240, 127
        %v2242 = vshll.u32 %v2241, 23
        %v2243 = vor.u32 4788187, %v2242
        %v2244 = vand.u32 2147483647, %v2243
        %v2246 = vcvt.s32.f32 %v2239
        %v2247 = vmul.f32 %v2246, %v2244
        %v2248 = vxor.u32 %v2247, 2147483648
        %v2249 = vsel %vm2166, %v2248, %v2247
        %v2250 = vsub.s32 4, %v2226
        %v2251 = vsel %vm2166, %v2250, %v2226
        %v2252 = vsel %vm2165, %v2060, %v2249
        %v2253 = vsel %vm2165, 0, %v2251
        %v2254 = vcosq.f32.pop %v2252
        %v2255 = vsinq.f32.pop %v2252
        %vm2256 = vweird.f32 %v2060
        %v2257 = vand.u32 %v2253, 3
        %vm2258 = vcmp.lt.s32.totalorder %v2257, 2
        %vm2259 = vcmp.eq.s32.totalorder %v2257, 0
        %v2260 = vxor.u32 %v2255, 2147483648
        %v2261 = vsel %vm2259, %v2254, %v2260
        %vm2262 = vcmp.eq.s32.totalorder %v2257, 2
        %v2263 = vxor.u32 %v2254, 2147483648
        %v2264 = vsel %vm2262, %v2263, %v2255
        %v2265 = vsel %vm2258, %v2261, %v2264
        %v2266 = vsel %vm2256, nan, %v2265
        %v2267 = vmul.f32 %v2051, %v2163
        %v2268 = vmul.f32 %v2058, %v2266
        %v2269 = vand.u32 2147483647, %v2059
        %vm2270 = vcmp.le.f32.partialorder %v2269, 0.7853982
        %vm2271 = vcmp.lt.s32.totalorder %v2059, 0
        %v2272 = vand.u32 %v2059, 2139095040
        %v2273 = vshrl.u32 %v2272, 23
        %v2274 = vsub.s32 %v2273, 127
        %v2275 = vand.u32 2147483647, %v2059
        %v2276 = vand.u32 %v2275, 8388607
        %v2277 = vor.u32 %v2276, 8388608
        %v2278 = vsub.s32 0, %v2277
        %v2279 = vadd.s32 %v2274, 1
        %vm2280 = vcmp.gt.s32.totalorder %v2279, 0
        %v2281 = vsel %vm2280, %v2279, 0
        %v2282 = vshrl.u32 %v2281, 5
        %v2283 = vand.u32 %v2281, 31
        %v2284 = vsub.s32 32, %v2283
        %v2285 = vshrl.u32 683565275, %v2284
        %v2286 = vshll.u32 683565275, %v2283
        %v2287 = vshrl.u32 2475754826, %v2284
        %v2288 = vor.u32 %v2286, %v2287
        %v2289 = vshll.u32 2475754826, %v2283
        %v2290 = vshrl.u32 2131351028, %v2284
        %v2291 = vor.u32 %v2289, %v2290
        %v2292 = vshll.u32 2131351028, %v2283
        %v2293 = vshrl.u32 2102212464, %v2284
        %v2294 = vor.u32 %v2292, %v2293
        %v2295 = vshll.u32 2102212464, %v2283
        %v2296 = vshrl.u32 920167782, %v2284
        %v2297 = vor.u32 %v2295, %v2296
        %v2298 = vshll.u32 920167782, %v2283
        %v2299 = vshrl.u32 1326507024, %v2284
        %v2300 = vor.u32 %v2298, %v2299
        %vm2301 = vcmp.lt.s32.totalorder %v2282, 1
        %vm2302 = vcmp.lt.s32.totalorder %v2282, 2
        %vm2303 = vcmp.lt.s32.totalorder %v2282, 3
        %vm2304 = vcmp.lt.s32.totalorder %v2282, 4
        %v2305 = vsel %vm2301, %v2285, %v2288
        %v2306 = vsel %vm2304, %v2294, 2102212464
        %v2307 = vsel %vm2303, %v2291, %v2306
        %v2308 = vsel %vm2302, %v2305, %v2307
        %v2309 = vsel %vm2301, %v2288, %v2291
        %v2310 = vsel %vm2304, %v2297, 920167782
        %v2311 = vsel %vm2303, %v2294, %v2310
        %v2312 = vsel %vm2302, %v2309, %v2311
        %v2313 = vsel %vm2301, %v2291, %v2294
        %v2314 = vsel %vm2304, %v2300, 1326507024
        %v2315 = vsel %vm2303, %v2297, %v2314
        %v2316 = vsel %vm2302, %v2313, %v2315
        %v2317 = vshll.u32 %v2277, 8
        %v2318 = vmul.u32.u64.compose %v2317, %v2316
        %v2319 = vextract.low.u32 %v2318
        %v2320 = vextract.high.u32 %v2318
        %v2321 = vmul.u32.u64.compose %v2317, %v2312
        %v2322 = vextract.low.u32 %v2321
        %v2323 = vextract.high.u32 %v2321
        %v2324 = vmul.u32 %v2317, %v2308
        %v2325 = vadd.s32 %v2320, %v2322
        %vm2326 = vc.u32 %v2320, %v2322
        %v2327 = vadd.s32 %v2323, 1
        %v2328 = vsel %vm2326, %v2327, %v2323
        %v2329 = vadd.s32 %v2324, %v2328
        %v2330 = vadd.s32 %v2329, 536870912
        %v2331 = vshrl.u32 %v2330, 30
        %v2332 = vshll.u32 %v2331, 30
        %v2333 = vsub.s32 %v2329, %v2332
        %vm2334 = vcmp.lt.s32.totalorder %v2333, 0
        %v2335 = vsub.s32 0, %v2333
        %v2336 = vsel %vm2334, %v2335, %v2333
        %v2337 = vclz %v2336
        %v2338 = vsub.s32 %v2337, 2
        %vm2339 = vcmp.gt.s32.totalorder 0, %v2338
        %v2340 = vsel %vm2339, 0, %v2338
        %v2341 = vsub.s32 32, %v2340
        %v2342 = vshll.u32 %v2333, %v2340
        %v2343 = vshrl.u32 %v2325, %v2341
        %v2344 = vor.u32 %v2342, %v2343
        %v2345 = vsub.s32 4294967266, %v2340
        %v2346 = vadd.s32 %v2345, 127
        %v2347 = vshll.u32 %v2346, 23
        %v2348 = vor.u32 4788187, %v2347
        %v2349 = vand.u32 2147483647, %v2348
        %v2351 = vcvt.s32.f32 %v2344
        %v2352 = vmul.f32 %v2351, %v2349
        %v2353 = vxor.u32 %v2352, 2147483648
        %v2354 = vsel %vm2271, %v2353, %v2352
        %v2355 = vsub.s32 4, %v2331
        %v2356 = vsel %vm2271, %v2355, %v2331
        %v2357 = vsel %vm2270, %v2059, %v2354
        %v2358 = vsel %vm2270, 0, %v2356
        %v2359 = vcosq.f32.pop %v2357
        %v2360 = vsinq.f32.pop %v2357
        %vm2361 = vweird.f32 %v2059
        %v2362 = vadd.s32 %v2358, 3
        %v2363 = vand.u32 %v2362, 3
        %vm2364 = vcmp.lt.s32.totalorder %v2363, 2
        %vm2365 = vcmp.eq.s32.totalorder %v2363, 0
        %v2366 = vxor.u32 %v2360, 2147483648
        %v2367 = vsel %vm2365, %v2359, %v2366
        %vm2368 = vcmp.eq.s32.totalorder %v2363, 2
        %v2369 = vxor.u32 %v2359, 2147483648
        %v2370 = vsel %vm2368, %v2369, %v2360
        %v2371 = vsel %vm2364, %v2367, %v2370
        %v2372 = vsel %vm2361, nan, %v2371
        %v2373 = vand.u32 2147483647, %v2060
        %vm2374 = vcmp.le.f32.partialorder %v2373, 0.7853982
        %vm2375 = vcmp.lt.s32.totalorder %v2060, 0
        %v2376 = vand.u32 %v2060, 2139095040
        %v2377 = vshrl.u32 %v2376, 23
        %v2378 = vsub.s32 %v2377, 127
        %v2379 = vand.u32 2147483647, %v2060
        %v2380 = vand.u32 %v2379, 8388607
        %v2381 = vor.u32 %v2380, 8388608
        %v2382 = vsub.s32 0, %v2381
        %v2383 = vadd.s32 %v2378, 1
        %vm2384 = vcmp.gt.s32.totalorder %v2383, 0
        %v2385 = vsel %vm2384, %v2383, 0
        %v2386 = vshrl.u32 %v2385, 5
        %v2387 = vand.u32 %v2385, 31
        %v2388 = vsub.s32 32, %v2387
        %v2389 = vshrl.u32 683565275, %v2388
        %v2390 = vshll.u32 683565275, %v2387
        %v2391 = vshrl.u32 2475754826, %v2388
        %v2392 = vor.u32 %v2390, %v2391
        %v2393 = vshll.u32 2475754826, %v2387
        %v2394 = vshrl.u32 2131351028, %v2388
        %v2395 = vor.u32 %v2393, %v2394
        %v2396 = vshll.u32 2131351028, %v2387
        %v2397 = vshrl.u32 2102212464, %v2388
        %v2398 = vor.u32 %v2396, %v2397
        %v2399 = vshll.u32 2102212464, %v2387
        %v2400 = vshrl.u32 920167782, %v2388
        %v2401 = vor.u32 %v2399, %v2400
        %v2402 = vshll.u32 920167782, %v2387
        %v2403 = vshrl.u32 1326507024, %v2388
        %v2404 = vor.u32 %v2402, %v2403
        %vm2405 = vcmp.lt.s32.totalorder %v2386, 1
        %vm2406 = vcmp.lt.s32.totalorder %v2386, 2
        %vm2407 = vcmp.lt.s32.totalorder %v2386, 3
        %vm2408 = vcmp.lt.s32.totalorder %v2386, 4
        %v2409 = vsel %vm2405, %v2389, %v2392
        %v2410 = vsel %vm2408, %v2398, 2102212464
        %v2411 = vsel %vm2407, %v2395, %v2410
        %v2412 = vsel %vm2406, %v2409, %v2411
        %v2413 = vsel %vm2405, %v2392, %v2395
        %v2414 = vsel %vm2408, %v2401, 920167782
        %v2415 = vsel %vm2407, %v2398, %v2414
        %v2416 = vsel %vm2406, %v2413, %v2415
        %v2417 = vsel %vm2405, %v2395, %v2398
        %v2418 = vsel %vm2408, %v2404, 1326507024
        %v2419 = vsel %vm2407, %v2401, %v2418
        %v2420 = vsel %vm2406, %v2417, %v2419
        %v2421 = vshll.u32 %v2381, 8
        %v2422 = vmul.u32.u64.compose %v2421, %v2420
        %v2423 = vextract.low.u32 %v2422
        %v2424 = vextract.high.u32 %v2422
        %v2425 = vmul.u32.u64.compose %v2421, %v2416
        %v2426 = vextract.low.u32 %v2425
        %v2427 = vextract.high.u32 %v2425
        %v2428 = vmul.u32 %v2421, %v2412
        %v2429 = vadd.s32 %v2424, %v2426
        %vm2430 = vc.u32 %v2424, %v2426
        %v2431 = vadd.s32 %v2427, 1
        %v2432 = vsel %vm2430, %v2431, %v2427
        %v2433 = vadd.s32 %v2428, %v2432
        %v2434 = vadd.s32 %v2433, 536870912
        %v2435 = vshrl.u32 %v2434, 30
        %v2436 = vshll.u32 %v2435, 30
        %v2437 = vsub.s32 %v2433, %v2436
        %vm2438 = vcmp.lt.s32.totalorder %v2437, 0
        %v2439 = vsub.s32 0, %v2437
        %v2440 = vsel %vm2438, %v2439, %v2437
        %v2441 = vclz %v2440
        %v2442 = vsub.s32 %v2441, 2
        %vm2443 = vcmp.gt.s32.totalorder 0, %v2442
        %v2444 = vsel %vm2443, 0, %v2442
        %v2445 = vsub.s32 32, %v2444
        %v2446 = vshll.u32 %v2437, %v2444
        %v2447 = vshrl.u32 %v2429, %v2445
        %v2448 = vor.u32 %v2446, %v2447
        %v2449 = vsub.s32 4294967266, %v2444
        %v2450 = vadd.s32 %v2449, 127
        %v2451 = vshll.u32 %v2450, 23
        %v2452 = vor.u32 4788187, %v2451
        %v2453 = vand.u32 2147483647, %v2452
        %v2455 = vcvt.s32.f32 %v2448
        %v2456 = vmul.f32 %v2455, %v2453
        %v2457 = vxor.u32 %v2456, 2147483648
        %v2458 = vsel %vm2375, %v2457, %v2456
        %v2459 = vsub.s32 4, %v2435
        %v2460 = vsel %vm2375, %v2459, %v2435
        %v2461 = vsel %vm2374, %v2060, %v2458
        %v2462 = vsel %vm2374, 0, %v2460
        %v2463 = vcosq.f32.pop %v2461
        %v2464 = vsinq.f32.pop %v2461
        %vm2465 = vweird.f32 %v2060
        %v2466 = vadd.s32 %v2462, 3
        %v2467 = vand.u32 %v2466, 3
        %vm2468 = vcmp.lt.s32.totalorder %v2467, 2
        %vm2469 = vcmp.eq.s32.totalorder %v2467, 0
        %v2470 = vxor.u32 %v2464, 2147483648
        %v2471 = vsel %vm2469, %v2463, %v2470
        %vm2472 = vcmp.eq.s32.totalorder %v2467, 2
        %v2473 = vxor.u32 %v2463, 2147483648
        %v2474 = vsel %vm2472, %v2473, %v2464
        %v2475 = vsel %vm2468, %v2471, %v2474
        %v2476 = vsel %vm2465, nan, %v2475
        %v2477 = vmul.f32 %v2051, %v2372
        %v2478 = vmul.f32 %v2058, %v2476
        %v2479 = vmul.f32 %v1487, 0.003
        %v2480 = vmul.f32 %v1488, 0.003
        %v2481 = vmul.f32 %v1489, 0.003
        %v2482 = vmul.f32 %v1490, 0.003
        %v2483 = vsub.f32 1.0, %v1487
        %v2484 = vsub.f32 1.0, %v1488
        %v2485 = vsub.f32 1.0, %v1489
        %v2486 = vsub.f32 1.0, %v1490
        %v2487 = vmul.f32 %v2483, 0.033333335
        %v2488 = vmul.f32 %v2484, 0.033333335
        %v2489 = vmul.f32 %v2485, 0.033333335
        %v2490 = vmul.f32 %v2486, 0.033333335
        %v2491 = vadd.f32 %v2479, %v2487
        %v2492 = vadd.f32 %v2480, %v2488
        %v2493 = vadd.f32 %v2481, %v2489
        %v2494 = vadd.f32 %v2482, %v2490
        %v2495 = vlaneseq
        %v2496 = vshrl.u32 %v2495, 7
        %v2497 = vsub.s32 0, %v2496
        %v2498 = vrot.slane %v2491, %v2497
        %v2499 = vlaneseq
        %v2500 = vshrl.u32 %v2499, 7
        %v2501 = vsub.s32 0, %v2500
        %v2502 = vrot.slane %v2492, %v2501
        %v2503 = vlaneseq
        %v2504 = vshrl.u32 %v2503, 7
        %v2505 = vsub.s32 0, %v2504
        %v2506 = vrot.slane %v2493, %v2505
        %v2507 = vlaneseq
        %v2508 = vshrl.u32 %v2507, 7
        %v2509 = vsub.s32 0, %v2508
        %v2510 = vrot.slane %v2494, %v2509
        %v2511 = vmul.f32 %v2498, %v2267
        %v2512 = vmul.f32 %v2502, %v2268
        %v2513 = vmul.f32 %v2506, %v2477
        %v2514 = vmul.f32 %v2510, %v2478
        %v2515 = vlaneseq
        %v2516 = vshrl.u32 %v2515, 7
        %v2517 = vsub.s32 0, %v2516
        %v2518 = vrot.slane %v1487, %v2517
        %v2519 = vlaneseq
        %v2520 = vshrl.u32 %v2519, 7
        %v2521 = vsub.s32 0, %v2520
        %v2522 = vrot.slane %v1488, %v2521
        %v2523 = vlaneseq
        %v2524 = vshrl.u32 %v2523, 7
        %v2525 = vsub.s32 0, %v2524
        %v2526 = vrot.slane %v1489, %v2525
        %v2527 = vlaneseq
        %v2528 = vshrl.u32 %v2527, 7
        %v2529 = vsub.s32 0, %v2528
        %v2530 = vrot.slane %v1490, %v2529
        %v2531 = vmul.f32 %v1959, %v2518
        %v2532 = vmul.f32 %v1960, %v2522
        %v2533 = vmul.f32 %v1961, %v2526
        %v2534 = vmul.f32 %v1962, %v2530
        %v2535 = vadd.f32 %v2531, %v2511
        %v2536 = vadd.f32 %v2532, %v2512
        %v2537 = vadd.f32 %v2533, %v2513
        %v2538 = vadd.f32 %v2534, %v2514
        %2539 = vst [vmem:[%s251] sm:$0xff] %v2535
        %2540 = vst [vmem:[%s251 + $0x8] sm:$0xff] %v2536
        %2541 = vst [vmem:[%s251 + $0x10] sm:$0xff] %v2537
        %2542 = vst [vmem:[%s251 + $0x18] sm:$0xff] %v2538
        %v2547 = vcombine.low %v1487, %v1488
        %v2548 = vcombine.low %v1489, %v1490
        %v2550 = vunpack.c.l.s4 1966171168
        %v2551 = vunpack.c.0.s8 %v2550
        %v2552 = vlaneseq
        %v2553 = vshrl.u32 %v2552, 7
        %v2554 = vsub.s32 %v2551, %v2553
        %v2555 = vrot.slane %v2547, %v2554
        %v2557 = vunpack.c.l.s4 1966171168
        %v2558 = vunpack.c.0.s8 %v2557
        %v2559 = vlaneseq
        %v2560 = vshrl.u32 %v2559, 7
        %v2561 = vsub.s32 %v2558, %v2560
        %v2562 = vrot.slane %v2548, %v2561
        %v2563 = vcombine.low %v2555, %v2562
        %v2565 = vunpack.c.l.s4 1966171168
        %v2566 = vunpack.c.0.s8 %v2565
        %v2567 = vlaneseq
        %v2568 = vshrl.u32 %v2567, 7
        %v2569 = vsub.s32 %v2566, %v2568
        %v2570 = vrot.slane %v2563, %v2569
        %v2572 = vlaneseq
        %vm2573 = vcmp.ge.s32.totalorder %v2572, 0
        %vm2574 = vcmp.lt.s32.totalorder %v2572, 512
        %vm2575 = vmand %vm2573, %vm2574
        %2576 = vst.msk [vmem:[%s258] sm:$0xf] %vm2575, %v2570
        %2577 = vst [vmem:[%s265] sm:$0xff] %v2511
        %2578 = vst [vmem:[%s265 + $0x8] sm:$0xff] %v2512
        %2579 = vst [vmem:[%s265 + $0x10] sm:$0xff] %v2513
        %2580 = vst [vmem:[%s265 + $0x18] sm:$0xff] %v2514
        %s2581 = sand.u32 %s117, 1
        %s2582 = scalar_lea.sflag [#allocation6], %s2581
        %s2583 = sand.u32 %s117, 1
        %s2584 = smul.addr %s2583, 32
        %s2585 = scalar_lea.vmem [#allocation5], %s2584
        %s2586 = sand.u32 %s25, 1
        %s2587 = scalar_lea.sflag [#allocation8], %s2586
        %s2588 = sand.u32 %s145, 1
        %s2589 = smul.addr %s2588, 4
        %s2590 = scalar_lea.vmem [#allocation7], %s2589
        %s2591 = sand.u32 %s25, 1
        %s2592 = scalar_lea.sflag [#allocation8], %s2591
        %s2593 = sand.u32 %s173, 1
        %s2594 = smul.addr %s2593, 32
        %s2595 = scalar_lea.vmem [#allocation9], %s2594
        // Predicated region
        $region37: #{tpu_custom_call.1} parent=31 // pred_check
          %p2596 = pneg %p127
        $region38: #{tpu_custom_call.1} parent=31 // pred_check_branch
          %2598 = sbr.rel (%p2596) target = $region40
        $region39: #{tpu_custom_call.1} parent=31 // pred_region
          %s2599 = smul.u32 4, %s30
          %s2601 = ssub.s32 512, 512
          %2602 = vsyncadd %s2582, %s2601
          %s2603 = smul.addr %s29, 12
          %s2604 = sadd.s32 %s2599, %s2603
          %s2605 = smul.addr %s2604, 128
          %s2606 = scalar_lea.hbm %s4, %s2605
          %s2608 = sshll.u32 %s2585, 4
          %s2609 = int_to_ptr.vmem [resolvable:$true] %s2608
          %2611 = dma.vmem_to_hbm [thread:$0]  %s2609, 512, %s2606, %s2582
        $region40: #{tpu_custom_call.1} parent=31 // pred_fallthru
          _
        // Predicated region
        $region41: #{tpu_custom_call.1} parent=31 // pred_check
          %p2612 = pneg %p155
        $region42: #{tpu_custom_call.1} parent=31 // pred_check_branch
          %2614 = sbr.rel (%p2612) target = $region44
        $region43: #{tpu_custom_call.1} parent=31 // pred_region
          %s2615 = smul.u32 4, %s30
          %s2617 = ssub.s32 64, 64
          %2618 = vsyncadd %s2587, %s2617
          %s2619 = smul.addr %s29, 12
          %s2620 = sadd.s32 %s2615, %s2619
          %s2621 = smul.addr %s2620, 16
          %s2622 = scalar_lea.hbm %s5, %s2621
          %s2624 = sshll.u32 %s2590, 4
          %s2625 = int_to_ptr.vmem [resolvable:$true] %s2624
          %2627 = dma.vmem_to_hbm [thread:$0]  %s2625, 64, %s2622, %s2587
        $region44: #{tpu_custom_call.1} parent=31 // pred_fallthru
          _
        // Predicated region
        $region45: #{tpu_custom_call.1} parent=31 // pred_check
          %p2628 = pneg %p183
        $region46: #{tpu_custom_call.1} parent=31 // pred_check_branch
          %2630 = sbr.rel (%p2628) target = $region48
        $region47: #{tpu_custom_call.1} parent=31 // pred_region
          %s2631 = smul.u32 4, %s30
          %s2633 = ssub.s32 512, 512
          %2634 = vsyncadd %s2592, %s2633
          %s2635 = smul.addr %s29, 12
          %s2636 = sadd.s32 %s2631, %s2635
          %s2637 = smul.addr %s2636, 128
          %s2638 = scalar_lea.hbm %s6, %s2637
          %s2640 = sshll.u32 %s2595, 4
          %s2641 = int_to_ptr.vmem [resolvable:$true] %s2640
          %2643 = dma.vmem_to_hbm [thread:$0]  %s2641, 512, %s2638, %s2592
        $region48: #{tpu_custom_call.1} parent=31 // pred_fallthru
          _
      $region32: #{tpu_custom_call.1} parent=5 // pred_fallthru
        _
      %p2644 = scmp.le.s32.totalorder 2, %s20
      // Predicated region
      $region49: #{tpu_custom_call.1} parent=5 // pred_check
        %p2645 = pneg %p2644
      $region50: #{tpu_custom_call.1} parent=5 // pred_check_branch
        %2647 = sbr.rel (%p2645) target = $region52
      $region51: #{tpu_custom_call.1} parent=5 // pred_region
        %s2648 = ssub.s32 %s20, 2
        // Predicated region
        $region53: #{tpu_custom_call.1} parent=51 // pred_check
          %p2649 = pneg %p133
        $region54: #{tpu_custom_call.1} parent=51 // pred_check_branch
          %2651 = sbr.rel (%p2649) target = $region56
        $region55: #{tpu_custom_call.1} parent=51 // pred_region
          %s2652 = sand.u32 %s118, 1
          %s2653 = scalar_lea.sflag [#allocation6], %s2652
          %s2654 = sand.u32 %s118, 1
          %s2655 = smul.addr %s2654, 32
          %s2656 = scalar_lea.vmem [#allocation5], %s2655
          %2657 = dma.done %s2653, 512
        $region56: #{tpu_custom_call.1} parent=51 // pred_fallthru
          _
        // Predicated region
        $region57: #{tpu_custom_call.1} parent=51 // pred_check
          %p2658 = pneg %p161
        $region58: #{tpu_custom_call.1} parent=51 // pred_check_branch
          %2660 = sbr.rel (%p2658) target = $region60
        $region59: #{tpu_custom_call.1} parent=51 // pred_region
          %s2661 = sand.u32 %s26, 1
          %s2662 = scalar_lea.sflag [#allocation8], %s2661
          %s2663 = sand.u32 %s146, 1
          %s2664 = smul.addr %s2663, 4
          %s2665 = scalar_lea.vmem [#allocation7], %s2664
          %2666 = dma.done %s2662, 64
        $region60: #{tpu_custom_call.1} parent=51 // pred_fallthru
          _
        // Predicated region
        $region61: #{tpu_custom_call.1} parent=51 // pred_check
          %p2667 = pneg %p189
        $region62: #{tpu_custom_call.1} parent=51 // pred_check_branch
          %2669 = sbr.rel (%p2667) target = $region64
        $region63: #{tpu_custom_call.1} parent=51 // pred_region
          %s2670 = sand.u32 %s26, 1
          %s2671 = scalar_lea.sflag [#allocation8], %s2670
          %s2672 = sand.u32 %s174, 1
          %s2673 = smul.addr %s2672, 32
          %s2674 = scalar_lea.vmem [#allocation9], %s2673
          %2675 = dma.done %s2671, 512
        $region64: #{tpu_custom_call.1} parent=51 // pred_fallthru
          _
      $region52: #{tpu_custom_call.1} parent=5 // pred_fallthru
        _
    $region6: #{tpu_custom_call.1} parent=1 // loop_footer
      %s24 = sadd.s32 1, %s20
    $region7: #{tpu_custom_call.1} parent=1 // loop_footer_branch
      %19 = sbr.rel target = $region3
    $region8: #{tpu_custom_call.1} parent=1 // loop_exit
      _
    %2676 = vsyncpa [#allocation6], 1
    %s2677 = scalar_lea.sflag [#allocation6], 1
    %2678 = vsyncpa %s2677, 1
    %2679 = vsyncpa [#allocation8], 1
    %s2680 = scalar_lea.sflag [#allocation8], 1
    %2681 = vsyncpa %s2680, 1

</llo_original>
